<compile_context>
chip_gen: v6e
topology: v6e:2x2x1
jax: 0.10.0
libtpu: 0.0.40
codegen_flags: <defaults>
</compile_context>

<pallas_src>
import numpy as np
import jax
import jax.numpy as jnp
from jax.experimental import pallas as pl
from jax.experimental.pallas import tpu as pltpu


def _gru_step(gi, h, whh, bhh):
    """PyTorch nn.GRUCell combine with gi = x @ W_ih^T + b_ih precomputed.
    Gate order (r, z, n).  h is float32; whh may be bf16 (MXU dtype)."""
    H = h.shape[-1]
    gh = jnp.dot(h.astype(whh.dtype), whh,
                 preferred_element_type=jnp.float32) + bhh
    r = jax.nn.sigmoid(gi[:, :H] + gh[:, :H])
    z = jax.nn.sigmoid(gi[:, H:2 * H] + gh[:, H:2 * H])
    n = jnp.tanh(gi[:, 2 * H:] + r * gh[:, 2 * H:])
    return (1.0 - z) * n + z * h


def dialogue_rnn_cell_kernel(
    # inputs
    u_ref, qmask_ref, qmask_rep_ref, ghist_ref, q0_ref, e0_ref,
    wih_g_u_ref, wih_g_q_ref, whh_g_ref, bih_g_ref, bhh_g_ref,
    wih_p_u_ref, wih_p_c_ref, whh_p_ref, bih_p_ref, bhh_p_ref,
    wih_e_ref, whh_e_ref, bih_e_ref, bhh_e_ref,
    watt_ref,
    # outputs
    ge_out_ref, q_out_ref, alpha_out_ref,
    # scratch (persist across the T grid axis)
    m_ref, l_ref, acc_ref,
):
    f32 = jnp.float32
    t = pl.program_id(1)
    n_t = pl.num_programs(1)
    t_chunk = ghist_ref.shape[0]

    # -------- streaming SimpleAttention: online softmax over the T axis --------
    @pl.when(t == 0)
    def _init():
        m_ref[...] = jnp.full_like(m_ref, -jnp.inf)
        l_ref[...] = jnp.zeros_like(l_ref)
        acc_ref[...] = jnp.zeros_like(acc_ref)

    gh = ghist_ref[...].astype(f32)                       # (Tc, Bc, D_g)
    watt = watt_ref[...].astype(f32)                      # (1, D_g)
    s = jnp.sum(gh * watt, axis=-1, keepdims=True)        # (Tc, Bc, 1) raw scores

    # stash raw scores in the resident alpha output block; normalized at the end
    t0 = pl.multiple_of(t * t_chunk, t_chunk)
    alpha_out_ref[pl.ds(t0, t_chunk), :, :] = s

    m_prev = m_ref[...]
    m_new = jnp.maximum(m_prev, jnp.max(s, axis=0, keepdims=True))
    corr = jnp.exp(m_prev - m_new)                        # (1, Bc, 1)
    p = jnp.exp(s - m_new)                                # (Tc, Bc, 1)
    l_ref[...] = l_ref[...] * corr + jnp.sum(p, axis=0, keepdims=True)
    acc_ref[...] = acc_ref[...] * corr + jnp.sum(p * gh, axis=0, keepdims=True)
    m_ref[...] = m_new

    # -------- GRU cells: only at the final T chunk (weights stay resident) -----
    @pl.when(t == n_t - 1)
    def _finalize():
        mmd = whh_g_ref.dtype                  # MXU dtype (f32 exact / bf16 prod)
        approx = mmd == jnp.bfloat16           # approx EUP recip only on the loose path

        inv_l = pl.reciprocal(l_ref[...], approx=approx)            # (1, Bc, 1)
        alpha_out_ref[...] = jnp.exp(alpha_out_ref[...] - m_ref[...]) * inv_l
        c_ = (acc_ref[...] * inv_l)[0]                              # (Bc, D_g) pool

        U = u_ref[...]                                              # (Bc, D_m)
        qmask = qmask_ref[...]                                      # (Bc, P) one-hot
        q0 = q0_ref[...]                                            # (Bc, P*D_p)
        P = qmask.shape[1]
        D_p = q0.shape[1] // P

        # speaker-party select via the one-hot mask (no argmax / selection matmul)
        q0_sel = q0[:, 0:D_p] * qmask[:, 0:1]
        for p_idx in range(1, P):
            q0_sel = q0_sel + q0[:, p_idx * D_p:(p_idx + 1) * D_p] * qmask[:, p_idx:p_idx + 1]

        # g_cell: GRU(cat[U, q0_sel], g_hist[-1]) via split-weight accumulated matmuls
        gi_g = (jnp.dot(U.astype(mmd), wih_g_u_ref[...], preferred_element_type=f32)
                + jnp.dot(q0_sel.astype(mmd), wih_g_q_ref[...], preferred_element_type=f32)
                + bih_g_ref[...])
        g_prev = ghist_ref[t_chunk - 1].astype(f32)                 # g_hist[-1] on final chunk
        g_new = _gru_step(gi_g, g_prev, whh_g_ref[...], bhh_g_ref[...])

        # p_cell: one-hot qmask + listener_state=False => only the speaker row of the
        # party GRU survives the blend, so run it on B rows (hidden = q0_sel).
        gi_p = (jnp.dot(U.astype(mmd), wih_p_u_ref[...], preferred_element_type=f32)
                + jnp.dot(c_.astype(mmd), wih_p_c_ref[...], preferred_element_type=f32)
                + bih_p_ref[...])
        qs_sel = _gru_step(gi_p, q0_sel, whh_p_ref[...], bhh_p_ref[...])   # (Bc, D_p)

        # blend back over the party axis; single lane-dense (Bc, P*D_p) store
        mrep = qmask_rep_ref[...]
        qs_tiled = jnp.concatenate([qs_sel] * P, axis=1)
        q_out_ref[...] = q0 * (1.0 - mrep) + qs_tiled * mrep

        # e_cell: the selected row of q_ is exactly qs_sel -> no second gather
        gi_e = (jnp.dot(qs_sel.astype(mmd), wih_e_ref[...], preferred_element_type=f32)
                + bih_e_ref[...])
        e_new = _gru_step(gi_e, e0_ref[...], whh_e_ref[...], bhh_e_ref[...])

        # packed lane-dense [g_, e_] slab, one store
        ge_out_ref[...] = jnp.concatenate([g_new, e_new], axis=1)


def make_params(key, D_m, D_g, D_p, D_e, dtype=jnp.float32):
    """Deterministic synthetic parameters. GRU weights stored transposed:
    W_ih -> (in, 3*hidden), W_hh -> (hidden, 3*hidden), biases -> (1, 3*hidden).
    Attention scalar stored as a (1, D_g) row."""
    def init(key, shape, fan):
        bound = 1.0 / np.sqrt(fan)
        return jax.random.uniform(key, shape, dtype, -bound, bound)

    keys = jax.random.split(key, 13)
    p = {}
    p["wih_g"] = init(keys[0], (D_m + D_p, 3 * D_g), D_g)
    p["whh_g"] = init(keys[1], (D_g, 3 * D_g), D_g)
    p["bih_g"] = init(keys[2], (1, 3 * D_g), D_g)
    p["bhh_g"] = init(keys[3], (1, 3 * D_g), D_g)
    p["wih_p"] = init(keys[4], (D_m + D_g, 3 * D_p), D_p)
    p["whh_p"] = init(keys[5], (D_p, 3 * D_p), D_p)
    p["bih_p"] = init(keys[6], (1, 3 * D_p), D_p)
    p["bhh_p"] = init(keys[7], (1, 3 * D_p), D_p)
    p["wih_e"] = init(keys[8], (D_p, 3 * D_e), D_e)
    p["whh_e"] = init(keys[9], (D_e, 3 * D_e), D_e)
    p["bih_e"] = init(keys[10], (1, 3 * D_e), D_e)
    p["bhh_e"] = init(keys[11], (1, 3 * D_e), D_e)
    p["watt"] = init(keys[12], (1, D_g), D_g)
    return p


def dialogue_rnn_cell(U, qmask, g_hist, q0, e0, params, *,
                      t_chunk=None, b_chunk=None,
                      matmul_dtype=jnp.float32):
    f32 = jnp.float32
    B, D_m = U.shape
    _, P = qmask.shape
    T, _, D_g = g_hist.shape
    D_p = q0.shape[2]
    D_e = e0.shape[1]

    # ---- tiling (TODO(synk): pad / BoundedSlice for ragged T, sub-batch tiles) ----
    if t_chunk is None or t_chunk > T or T % t_chunk != 0:
        t_chunk = T
    if b_chunk is None or b_chunk > B or B % b_chunk != 0 or (b_chunk != B and b_chunk % 8 != 0):
        b_chunk = B                      # (8,128) BlockSpec rule on the batch tile
    n_b, n_t = B // b_chunk, T // t_chunk

    mmd = jnp.dtype(matmul_dtype)
    # Wrapper-side layout plumbing (free XLA ops): flatten party axis into lanes,
    # expand the party mask to the same lane layout, split the W_ih blocks so the
    # kernel runs accumulated matmuls instead of lane-concats.
    q0_2d = q0.reshape(B, P * D_p)
    qmask_rep = jnp.repeat(qmask, D_p, axis=1)                      # (B, P*D_p)
    g_hist_k = g_hist.astype(mmd)       # bf16 halves the dominant HBM read on v6e/v7x

    weights = (
        params["wih_g"][:D_m].astype(mmd), params["wih_g"][D_m:].astype(mmd),
        params["whh_g"].astype(mmd), params["bih_g"].astype(f32), params["bhh_g"].astype(f32),
        params["wih_p"][:D_m].astype(mmd), params["wih_p"][D_m:].astype(mmd),
        params["whh_p"].astype(mmd), params["bih_p"].astype(f32), params["bhh_p"].astype(f32),
        params["wih_e"].astype(mmd), params["whh_e"].astype(mmd),
        params["bih_e"].astype(f32), params["bhh_e"].astype(f32),
        params["watt"].astype(f32),
    )

    idx_b2 = lambda b, t: (b, 0)
    idx_gh = lambda b, t: (t, b, 0)
    idx_w = lambda b, t: (0, 0)          # constant -> weights stay VMEM-resident

    in_specs = [
        pl.BlockSpec((b_chunk, D_m), idx_b2),                # U
        pl.BlockSpec((b_chunk, P), idx_b2),                  # qmask
        pl.BlockSpec((b_chunk, P * D_p), idx_b2),            # qmask replicated per feature
        pl.BlockSpec((t_chunk, b_chunk, D_g), idx_gh),       # g_hist (streamed over T)
        pl.BlockSpec((b_chunk, P * D_p), idx_b2),            # q0 (party folded into lanes)
        pl.BlockSpec((b_chunk, D_e), idx_b2),                # e0
    ] + [pl.BlockSpec(w.shape, idx_w) for w in weights]

    out_specs = (
        pl.BlockSpec((b_chunk, D_g + D_e), idx_b2),          # packed [g_, e_]
        pl.BlockSpec((b_chunk, P * D_p), idx_b2),            # q_
        pl.BlockSpec((T, b_chunk, 1), lambda b, t: (0, b, 0)),  # alpha (seq-major)
    )
    out_shape = (
        jax.ShapeDtypeStruct((B, D_g + D_e), f32),
        jax.ShapeDtypeStruct((B, P * D_p), f32),
        jax.ShapeDtypeStruct((T, B, 1), f32),
    )
    scratch_shapes = [
        pltpu.VMEM((1, b_chunk, 1), f32),         # running max
        pltpu.VMEM((1, b_chunk, 1), f32),         # running denom
        pltpu.VMEM((1, b_chunk, D_g), f32),       # running weighted pool
    ]

    # scoped-VMEM limit sized from the actual tile budget; cap for v7x's 64 MiB VMEM
    def _nbytes(shape, dt):
        return int(np.prod(shape)) * jnp.dtype(dt).itemsize
    est = (
        2 * _nbytes((t_chunk, b_chunk, D_g), mmd)
        + 2 * (_nbytes((b_chunk, D_m), f32) + _nbytes((b_chunk, P), f32)
               + 3 * _nbytes((b_chunk, P * D_p), f32) + _nbytes((b_chunk, D_e), f32)
               + _nbytes((b_chunk, D_g + D_e), f32) + _nbytes((T, b_chunk, 1), f32))
        + 2 * sum(_nbytes(w.shape, w.dtype) for w in weights)
        + _nbytes((1, b_chunk, D_g), f32) + 2 * _nbytes((1, b_chunk, 1), f32)
    )
    vmem_limit = int(min(64 * 1024 * 1024, max(8 * 1024 * 1024, 2 * est)))

    ge, q_2d, alpha_tb1 = pl.pallas_call(
        dialogue_rnn_cell_kernel,
        grid=(n_b, n_t),
        in_specs=in_specs,
        out_specs=out_specs,
        out_shape=out_shape,
        scratch_shapes=scratch_shapes,
        compiler_params=pltpu.CompilerParams(
            dimension_semantics=("parallel", "arbitrary"),
            vmem_limit_bytes=vmem_limit),
    )(U, qmask, qmask_rep, g_hist_k, q0_2d, e0, *weights)

    g_ = ge[:, :D_g]
    e_ = ge[:, D_g:]
    q_ = q_2d.reshape(B, P, D_p)
    alpha = jnp.transpose(alpha_tb1[:, :, 0], (1, 0))[:, None, :]   # (B, 1, T)
    return g_, q_, e_, alpha


# ---------------- pure-JAX reference (mirrors the PyTorch forward) -------------
def _gru_ref(x, h, wih, whh, bih, bhh):
    gi = x @ wih + bih
    gh = h @ whh + bhh
    H = h.shape[1]
    r = jax.nn.sigmoid(gi[:, :H] + gh[:, :H])
    z = jax.nn.sigmoid(gi[:, H:2 * H] + gh[:, H:2 * H])
    n = jnp.tanh(gi[:, 2 * H:] + r * gh[:, 2 * H:])
    return (1.0 - z) * n + z * h


def reference(U, qmask, g_hist, q0, e0, params):
    B = U.shape[0]
    qm_idx = jnp.argmax(qmask, axis=1)
    q0_sel = q0[jnp.arange(B), qm_idx]
    g_ = _gru_ref(jnp.concatenate([U, q0_sel], axis=1), g_hist[-1],
                  params["wih_g"], params["whh_g"], params["bih_g"], params["bhh_g"])
    scale = jnp.einsum("tbd,od->tbo", g_hist, params["watt"])        # (T,B,1)
    alpha = jax.nn.softmax(scale, axis=0)
    alpha_bt = jnp.transpose(alpha[:, :, 0], (1, 0))                 # (B,T)
    c_ = jnp.einsum("bt,tbd->bd", alpha_bt, g_hist)
    P = qmask.shape[1]
    U_c = jnp.concatenate([U, c_], axis=1)
    U_c = jnp.broadcast_to(U_c[:, None, :], (B, P, U_c.shape[1])).reshape(B * P, -1)
    qs = _gru_ref(U_c, q0.reshape(B * P, -1),
                  params["wih_p"], params["whh_p"], params["bih_p"], params["bhh_p"])
    qs = qs.reshape(B, P, -1)
    q_ = q0 * (1.0 - qmask[:, :, None]) + qs * qmask[:, :, None]
    q_sel = q_[jnp.arange(B), qm_idx]
    e_ = _gru_ref(q_sel, e0,
                  params["wih_e"], params["whh_e"], params["bih_e"], params["bhh_e"])
    return g_, q_, e_, alpha_bt[:, None, :]


if __name__ == "__main__":
    B, P, T = 2, 2, 4
    D_m = D_g = D_p = D_e = 32
    key = jax.random.PRNGKey(0)
    k1, k2, k3, k4, k5, kp = jax.random.split(key, 6)

    U = jax.random.normal(k1, (B, D_m), jnp.float32)
    speaker = jax.random.randint(k2, (B,), 0, P)
    qmask = jax.nn.one_hot(speaker, P, dtype=jnp.float32)           # (B, P) one-hot
    g_hist = jax.random.normal(k3, (T, B, D_g), jnp.float32)
    q0 = jax.random.normal(k4, (B, P, D_p), jnp.float32)
    e0 = jax.random.normal(k5, (B, D_e), jnp.float32)
    params = make_params(kp, D_m, D_g, D_p, D_e)

    rg, rq, re, ra = reference(U, qmask, g_hist, q0, e0, params)

    # exact f32 path; t_chunk=2 -> two streamed g_hist chunks exercise the
    # online-softmax accumulator + resident-output pipeline.
    g_, q_, e_, alpha = dialogue_rnn_cell(U, qmask, g_hist, q0, e0, params, t_chunk=2)
    jax.block_until_ready((g_, q_, e_, alpha))
    np.testing.assert_allclose(np.asarray(g_), np.asarray(rg), rtol=2e-5, atol=2e-5)
    np.testing.assert_allclose(np.asarray(q_), np.asarray(rq), rtol=2e-5, atol=2e-5)
    np.testing.assert_allclose(np.asarray(e_), np.asarray(re), rtol=2e-5, atol=2e-5)
    np.testing.assert_allclose(np.asarray(alpha), np.asarray(ra), rtol=2e-5, atol=2e-5)

    # bf16-MXU production path (v6e / v7x): loose sanity tolerance only.
    g_b, q_b, e_b, alpha_b = dialogue_rnn_cell(U, qmask, g_hist, q0, e0, params,
                                               t_chunk=2, matmul_dtype=jnp.bfloat16)
    jax.block_until_ready((g_b, q_b, e_b, alpha_b))
    for got, want in zip((g_b, q_b, e_b, alpha_b), (rg, rq, re, ra)):
        np.testing.assert_allclose(np.asarray(got), np.asarray(want),
                                   rtol=5e-2, atol=1e-1)

    print("KERNEL_OK")
</pallas_src>

<mosaic_0001>
module attributes {stable_mosaic.version = 11 : i64} {
  func.func @dialogue_rnn_cell_kernel(%arg0: i32, %arg1: i32, %arg2: memref<2x32xf32, #tpu.memory_space<vmem>>, %arg3: memref<2x2xf32, #tpu.memory_space<vmem>>, %arg4: memref<2x64xf32, #tpu.memory_space<vmem>>, %arg5: memref<2x2x32xf32, #tpu.memory_space<vmem>>, %arg6: memref<2x64xf32, #tpu.memory_space<vmem>>, %arg7: memref<2x32xf32, #tpu.memory_space<vmem>>, %arg8: memref<32x96xf32, #tpu.memory_space<vmem>>, %arg9: memref<32x96xf32, #tpu.memory_space<vmem>>, %arg10: memref<32x96xf32, #tpu.memory_space<vmem>>, %arg11: memref<1x96xf32, #tpu.memory_space<vmem>>, %arg12: memref<1x96xf32, #tpu.memory_space<vmem>>, %arg13: memref<32x96xf32, #tpu.memory_space<vmem>>, %arg14: memref<32x96xf32, #tpu.memory_space<vmem>>, %arg15: memref<32x96xf32, #tpu.memory_space<vmem>>, %arg16: memref<1x96xf32, #tpu.memory_space<vmem>>, %arg17: memref<1x96xf32, #tpu.memory_space<vmem>>, %arg18: memref<32x96xf32, #tpu.memory_space<vmem>>, %arg19: memref<32x96xf32, #tpu.memory_space<vmem>>, %arg20: memref<1x96xf32, #tpu.memory_space<vmem>>, %arg21: memref<1x96xf32, #tpu.memory_space<vmem>>, %arg22: memref<1x32xf32, #tpu.memory_space<vmem>>, %arg23: memref<2x64xf32, #tpu.memory_space<vmem>>, %arg24: memref<2x64xf32, #tpu.memory_space<vmem>>, %arg25: memref<4x2x1xf32, #tpu.memory_space<vmem>>, %arg26: memref<1x2x1xf32, #tpu.memory_space<vmem>>, %arg27: memref<1x2x1xf32, #tpu.memory_space<vmem>>, %arg28: memref<1x2x32xf32, #tpu.memory_space<vmem>>) attributes {dimension_semantics = [#tpu.dimension_semantics<parallel>, #tpu.dimension_semantics<arbitrary>], iteration_bounds = array<i64: 1, 2>, scalar_prefetch = 0 : i64, scratch_operands = 3 : i64, tpu.core_type = #tpu.core_type<tc>, window_params = [{transform_indices = @transform_0, window_bounds = array<i64: 2, 32>}, {transform_indices = @transform_1, window_bounds = array<i64: 2, 2>}, {transform_indices = @transform_2, window_bounds = array<i64: 2, 64>}, {transform_indices = @transform_3, window_bounds = array<i64: 2, 2, 32>}, {transform_indices = @transform_4, window_bounds = array<i64: 2, 64>}, {transform_indices = @transform_5, window_bounds = array<i64: 2, 32>}, {pipeline_mode = #tpu.pipeline_mode<synchronous>, transform_indices = @transform_6, window_bounds = array<i64: 32, 96>}, {pipeline_mode = #tpu.pipeline_mode<synchronous>, transform_indices = @transform_7, window_bounds = array<i64: 32, 96>}, {pipeline_mode = #tpu.pipeline_mode<synchronous>, transform_indices = @transform_8, window_bounds = array<i64: 32, 96>}, {pipeline_mode = #tpu.pipeline_mode<synchronous>, transform_indices = @transform_9, window_bounds = array<i64: 1, 96>}, {pipeline_mode = #tpu.pipeline_mode<synchronous>, transform_indices = @transform_10, window_bounds = array<i64: 1, 96>}, {pipeline_mode = #tpu.pipeline_mode<synchronous>, transform_indices = @transform_11, window_bounds = array<i64: 32, 96>}, {pipeline_mode = #tpu.pipeline_mode<synchronous>, transform_indices = @transform_12, window_bounds = array<i64: 32, 96>}, {pipeline_mode = #tpu.pipeline_mode<synchronous>, transform_indices = @transform_13, window_bounds = array<i64: 32, 96>}, {pipeline_mode = #tpu.pipeline_mode<synchronous>, transform_indices = @transform_14, window_bounds = array<i64: 1, 96>}, {pipeline_mode = #tpu.pipeline_mode<synchronous>, transform_indices = @transform_15, window_bounds = array<i64: 1, 96>}, {pipeline_mode = #tpu.pipeline_mode<synchronous>, transform_indices = @transform_16, window_bounds = array<i64: 32, 96>}, {pipeline_mode = #tpu.pipeline_mode<synchronous>, transform_indices = @transform_17, window_bounds = array<i64: 32, 96>}, {pipeline_mode = #tpu.pipeline_mode<synchronous>, transform_indices = @transform_18, window_bounds = array<i64: 1, 96>}, {pipeline_mode = #tpu.pipeline_mode<synchronous>, transform_indices = @transform_19, window_bounds = array<i64: 1, 96>}, {pipeline_mode = #tpu.pipeline_mode<synchronous>, transform_indices = @transform_20, window_bounds = array<i64: 1, 32>}, {transform_indices = @transform_21, window_bounds = array<i64: 2, 64>}, {transform_indices = @transform_22, window_bounds = array<i64: 2, 64>}, {transform_indices = @transform_23, window_bounds = array<i64: 4, 2, 1>}]} {
    %c0_i32 = arith.constant 0 : i32
    %0 = arith.cmpi eq, %arg1, %c0_i32 : i32
    %1 = arith.extui %0 : i1 to i32
    %c0_i32_0 = arith.constant 0 : i32
    %2 = arith.cmpi ne, %1, %c0_i32_0 : i32
    scf.if %2 {
      %cst_29 = arith.constant 0xFF800000 : f32
      %42 = vector.broadcast %cst_29 : f32 to vector<1x2x1xf32>
      %c0_30 = arith.constant 0 : index
      %c0_31 = arith.constant 0 : index
      %c0_32 = arith.constant 0 : index
      %43 = vector.load %arg26[%c0_30, %c0_31, %c0_32] : memref<1x2x1xf32, #tpu.memory_space<vmem>>, vector<1x2x1xf32>
      tpu.vector_store %arg26[%c0_30, %c0_31, %c0_32], %42 {strides = array<i32>} : memref<1x2x1xf32, #tpu.memory_space<vmem>>, vector<1x2x1xf32>,
      %cst_33 = arith.constant 0.000000e+00 : f32
      %44 = vector.broadcast %cst_33 : f32 to vector<1x2x1xf32>
      %c0_34 = arith.constant 0 : index
      %c0_35 = arith.constant 0 : index
      %c0_36 = arith.constant 0 : index
      %45 = vector.load %arg27[%c0_34, %c0_35, %c0_36] : memref<1x2x1xf32, #tpu.memory_space<vmem>>, vector<1x2x1xf32>
      tpu.vector_store %arg27[%c0_34, %c0_35, %c0_36], %44 {strides = array<i32>} : memref<1x2x1xf32, #tpu.memory_space<vmem>>, vector<1x2x1xf32>,
      %cst_37 = arith.constant 0.000000e+00 : f32
      %46 = vector.broadcast %cst_37 : f32 to vector<1x2x32xf32>
      %c0_38 = arith.constant 0 : index
      %c0_39 = arith.constant 0 : index
      %c0_40 = arith.constant 0 : index
      %47 = vector.load %arg28[%c0_38, %c0_39, %c0_40] : memref<1x2x32xf32, #tpu.memory_space<vmem>>, vector<1x2x32xf32>
      tpu.vector_store %arg28[%c0_38, %c0_39, %c0_40], %46 {strides = array<i32>} : memref<1x2x32xf32, #tpu.memory_space<vmem>>, vector<1x2x32xf32>,
    } else {
    }
    %c0 = arith.constant 0 : index
    %c0_1 = arith.constant 0 : index
    %c0_2 = arith.constant 0 : index
    %3 = vector.load %arg5[%c0, %c0_1, %c0_2] : memref<2x2x32xf32, #tpu.memory_space<vmem>>, vector<2x2x32xf32>
    %c0_3 = arith.constant 0 : index
    %c0_4 = arith.constant 0 : index
    %4 = vector.load %arg22[%c0_3, %c0_4] : memref<1x32xf32, #tpu.memory_space<vmem>>, vector<1x32xf32>
    %5 = vector.shape_cast %4 : vector<1x32xf32> to vector<1x1x32xf32>
    %6 = vector.broadcast %5 : vector<1x1x32xf32> to vector<2x2x32xf32>
    %7 = arith.mulf %3, %6 : vector<2x2x32xf32>
    %cst = arith.constant dense<0.000000e+00> : vector<2x2xf32>
    %8 = vector.multi_reduction <add>, %7, %cst [2] : vector<2x2x32xf32> to vector<2x2xf32>
    %9 = vector.shape_cast %8 : vector<2x2xf32> to vector<2x2x1xf32>
    %c2_i32 = arith.constant 2 : i32
    %10 = arith.muli %arg1, %c2_i32 : i32
    %11 = tpu.assume_multiple %10, 2 : i32
    %12 = arith.index_cast %11 : i32 to index
    %c0_5 = arith.constant 0 : index
    %c0_6 = arith.constant 0 : index
    %13 = vector.load %arg25[%12, %c0_5, %c0_6] : memref<4x2x1xf32, #tpu.memory_space<vmem>>, vector<2x2x1xf32>
    tpu.vector_store %arg25[%12, %c0_5, %c0_6], %9 {strides = array<i32>} : memref<4x2x1xf32, #tpu.memory_space<vmem>>, vector<2x2x1xf32>,
    %c0_7 = arith.constant 0 : index
    %c0_8 = arith.constant 0 : index
    %c0_9 = arith.constant 0 : index
    %14 = vector.load %arg26[%c0_7, %c0_8, %c0_9] : memref<1x2x1xf32, #tpu.memory_space<vmem>>, vector<1x2x1xf32>
    %cst_10 = arith.constant dense<0xFF800000> : vector<2x1xf32>
    %15 = vector.multi_reduction <maximumf>, %9, %cst_10 [0] : vector<2x2x1xf32> to vector<2x1xf32>
    %16 = vector.shape_cast %15 : vector<2x1xf32> to vector<1x2x1xf32>
    %17 = arith.maximumf %14, %16 : vector<1x2x1xf32>
    %18 = arith.subf %14, %17 : vector<1x2x1xf32>
    %19 = math.exp %18 : vector<1x2x1xf32>
    %20 = vector.broadcast %17 : vector<1x2x1xf32> to vector<2x2x1xf32>
    %21 = arith.subf %9, %20 : vector<2x2x1xf32>
    %22 = math.exp %21 : vector<2x2x1xf32>
    %c0_11 = arith.constant 0 : index
    %c0_12 = arith.constant 0 : index
    %c0_13 = arith.constant 0 : index
    %23 = vector.load %arg27[%c0_11, %c0_12, %c0_13] : memref<1x2x1xf32, #tpu.memory_space<vmem>>, vector<1x2x1xf32>
    %24 = arith.mulf %23, %19 : vector<1x2x1xf32>
    %cst_14 = arith.constant dense<0.000000e+00> : vector<2x1xf32>
    %25 = vector.multi_reduction <add>, %22, %cst_14 [0] : vector<2x2x1xf32> to vector<2x1xf32>
    %26 = vector.shape_cast %25 : vector<2x1xf32> to vector<1x2x1xf32>
    %27 = arith.addf %24, %26 : vector<1x2x1xf32>
    %c0_15 = arith.constant 0 : index
    %c0_16 = arith.constant 0 : index
    %c0_17 = arith.constant 0 : index
    %28 = vector.load %arg27[%c0_15, %c0_16, %c0_17] : memref<1x2x1xf32, #tpu.memory_space<vmem>>, vector<1x2x1xf32>
    tpu.vector_store %arg27[%c0_15, %c0_16, %c0_17], %27 {strides = array<i32>} : memref<1x2x1xf32, #tpu.memory_space<vmem>>, vector<1x2x1xf32>,
    %c0_18 = arith.constant 0 : index
    %c0_19 = arith.constant 0 : index
    %c0_20 = arith.constant 0 : index
    %29 = vector.load %arg28[%c0_18, %c0_19, %c0_20] : memref<1x2x32xf32, #tpu.memory_space<vmem>>, vector<1x2x32xf32>
    %30 = vector.broadcast %19 : vector<1x2x1xf32> to vector<1x2x32xf32>
    %31 = arith.mulf %29, %30 : vector<1x2x32xf32>
    %32 = vector.broadcast %22 : vector<2x2x1xf32> to vector<2x2x32xf32>
    %33 = arith.mulf %32, %3 : vector<2x2x32xf32>
    %cst_21 = arith.constant dense<0.000000e+00> : vector<2x32xf32>
    %34 = vector.multi_reduction <add>, %33, %cst_21 [0] : vector<2x2x32xf32> to vector<2x32xf32>
    %35 = vector.shape_cast %34 : vector<2x32xf32> to vector<1x2x32xf32>
    %36 = arith.addf %31, %35 : vector<1x2x32xf32>
    %c0_22 = arith.constant 0 : index
    %c0_23 = arith.constant 0 : index
    %c0_24 = arith.constant 0 : index
    %37 = vector.load %arg28[%c0_22, %c0_23, %c0_24] : memref<1x2x32xf32, #tpu.memory_space<vmem>>, vector<1x2x32xf32>
    tpu.vector_store %arg28[%c0_22, %c0_23, %c0_24], %36 {strides = array<i32>} : memref<1x2x32xf32, #tpu.memory_space<vmem>>, vector<1x2x32xf32>,
    %c0_25 = arith.constant 0 : index
    %c0_26 = arith.constant 0 : index
    %c0_27 = arith.constant 0 : index
    %38 = vector.load %arg26[%c0_25, %c0_26, %c0_27] : memref<1x2x1xf32, #tpu.memory_space<vmem>>, vector<1x2x1xf32>
    tpu.vector_store %arg26[%c0_25, %c0_26, %c0_27], %17 {strides = array<i32>} : memref<1x2x1xf32, #tpu.memory_space<vmem>>, vector<1x2x1xf32>,
    %c1_i32 = arith.constant 1 : i32
    %39 = arith.cmpi eq, %arg1, %c1_i32 : i32
    %40 = arith.extui %39 : i1 to i32
    %c0_i32_28 = arith.constant 0 : i32
    %41 = arith.cmpi ne, %40, %c0_i32_28 : i32
    scf.if %41 {
      %c0_29 = arith.constant 0 : index
      %c0_30 = arith.constant 0 : index
      %c0_31 = arith.constant 0 : index
      %42 = vector.load %arg27[%c0_29, %c0_30, %c0_31] : memref<1x2x1xf32, #tpu.memory_space<vmem>>, vector<1x2x1xf32>
      %43 = tpu.reciprocal %42 : vector<1x2x1xf32> -> vector<1x2x1xf32>
      %c0_32 = arith.constant 0 : index
      %c0_33 = arith.constant 0 : index
      %c0_34 = arith.constant 0 : index
      %44 = vector.load %arg25[%c0_32, %c0_33, %c0_34] : memref<4x2x1xf32, #tpu.memory_space<vmem>>, vector<4x2x1xf32>
      %c0_35 = arith.constant 0 : index
      %c0_36 = arith.constant 0 : index
      %c0_37 = arith.constant 0 : index
      %45 = vector.load %arg26[%c0_35, %c0_36, %c0_37] : memref<1x2x1xf32, #tpu.memory_space<vmem>>, vector<1x2x1xf32>
      %46 = vector.broadcast %45 : vector<1x2x1xf32> to vector<4x2x1xf32>
      %47 = arith.subf %44, %46 : vector<4x2x1xf32>
      %48 = math.exp %47 : vector<4x2x1xf32>
      %49 = vector.broadcast %43 : vector<1x2x1xf32> to vector<4x2x1xf32>
      %50 = arith.mulf %48, %49 : vector<4x2x1xf32>
      %c0_38 = arith.constant 0 : index
      %c0_39 = arith.constant 0 : index
      %c0_40 = arith.constant 0 : index
      %51 = vector.load %arg25[%c0_38, %c0_39, %c0_40] : memref<4x2x1xf32, #tpu.memory_space<vmem>>, vector<4x2x1xf32>
      tpu.vector_store %arg25[%c0_38, %c0_39, %c0_40], %50 {strides = array<i32>} : memref<4x2x1xf32, #tpu.memory_space<vmem>>, vector<4x2x1xf32>,
      %c0_41 = arith.constant 0 : index
      %c0_42 = arith.constant 0 : index
      %c0_43 = arith.constant 0 : index
      %52 = vector.load %arg28[%c0_41, %c0_42, %c0_43] : memref<1x2x32xf32, #tpu.memory_space<vmem>>, vector<1x2x32xf32>
      %53 = vector.broadcast %43 : vector<1x2x1xf32> to vector<1x2x32xf32>
      %54 = arith.mulf %52, %53 : vector<1x2x32xf32>
      %55 = vector.shape_cast %54 : vector<1x2x32xf32> to vector<2x32xf32>
      %c0_44 = arith.constant 0 : index
      %c0_45 = arith.constant 0 : index
      %56 = vector.load %arg2[%c0_44, %c0_45] : memref<2x32xf32, #tpu.memory_space<vmem>>, vector<2x32xf32>
      %c0_46 = arith.constant 0 : index
      %c0_47 = arith.constant 0 : index
      %57 = vector.load %arg3[%c0_46, %c0_47] : memref<2x2xf32, #tpu.memory_space<vmem>>, vector<2x2xf32>
      %c0_48 = arith.constant 0 : index
      %c0_49 = arith.constant 0 : index
      %58 = vector.load %arg6[%c0_48, %c0_49] : memref<2x64xf32, #tpu.memory_space<vmem>>, vector<2x64xf32>
      %59 = vector.extract_strided_slice %58 {offsets = [0, 0], sizes = [2, 32], strides = [1, 1]} : vector<2x64xf32> to vector<2x32xf32>
      %60 = vector.extract_strided_slice %57 {offsets = [0, 0], sizes = [2, 1], strides = [1, 1]} : vector<2x2xf32> to vector<2x1xf32>
      %61 = vector.broadcast %60 : vector<2x1xf32> to vector<2x32xf32>
      %62 = arith.mulf %59, %61 : vector<2x32xf32>
      %63 = vector.extract_strided_slice %58 {offsets = [0, 32], sizes = [2, 32], strides = [1, 1]} : vector<2x64xf32> to vector<2x32xf32>
      %64 = vector.extract_strided_slice %57 {offsets = [0, 1], sizes = [2, 1], strides = [1, 1]} : vector<2x2xf32> to vector<2x1xf32>
      %65 = vector.broadcast %64 : vector<2x1xf32> to vector<2x32xf32>
      %66 = arith.mulf %63, %65 : vector<2x32xf32>
      %67 = arith.addf %62, %66 : vector<2x32xf32>
      %c0_50 = arith.constant 0 : index
      %c0_51 = arith.constant 0 : index
      %68 = vector.load %arg8[%c0_50, %c0_51] : memref<32x96xf32, #tpu.memory_space<vmem>>, vector<32x96xf32>
      %cst_52 = arith.constant dense<0.000000e+00> : vector<2x96xf32>
      %69 = tpu.matmul %56, %68, %cst_52 {dimension_numbers = #tpu.dot_dimension_numbers<[1], [0], [0], [1], [0, 0, 1, 1], [], []>} : vector<2x32xf32>, vector<32x96xf32>, vector<2x96xf32> -> vector<2x96xf32>
      %c0_53 = arith.constant 0 : index
      %c0_54 = arith.constant 0 : index
      %70 = vector.load %arg9[%c0_53, %c0_54] : memref<32x96xf32, #tpu.memory_space<vmem>>, vector<32x96xf32>
      %cst_55 = arith.constant dense<0.000000e+00> : vector<2x96xf32>
      %71 = tpu.matmul %67, %70, %cst_55 {dimension_numbers = #tpu.dot_dimension_numbers<[1], [0], [0], [1], [0, 0, 1, 1], [], []>} : vector<2x32xf32>, vector<32x96xf32>, vector<2x96xf32> -> vector<2x96xf32>
      %72 = arith.addf %69, %71 : vector<2x96xf32>
      %c0_56 = arith.constant 0 : index
      %c0_57 = arith.constant 0 : index
      %73 = vector.load %arg11[%c0_56, %c0_57] : memref<1x96xf32, #tpu.memory_space<vmem>>, vector<1x96xf32>
      %74 = vector.broadcast %73 : vector<1x96xf32> to vector<2x96xf32>
      %75 = arith.addf %72, %74 : vector<2x96xf32>
      %c1 = arith.constant 1 : index
      %c0_58 = arith.constant 0 : index
      %c0_59 = arith.constant 0 : index
      %76 = vector.load %arg5[%c1, %c0_58, %c0_59] : memref<2x2x32xf32, #tpu.memory_space<vmem>>, vector<1x2x32xf32>
      %77 = vector.shape_cast %76 : vector<1x2x32xf32> to vector<2x32xf32>
      %c0_60 = arith.constant 0 : index
      %c0_61 = arith.constant 0 : index
      %78 = vector.load %arg10[%c0_60, %c0_61] : memref<32x96xf32, #tpu.memory_space<vmem>>, vector<32x96xf32>
      %c0_62 = arith.constant 0 : index
      %c0_63 = arith.constant 0 : index
      %79 = vector.load %arg12[%c0_62, %c0_63] : memref<1x96xf32, #tpu.memory_space<vmem>>, vector<1x96xf32>
      %cst_64 = arith.constant dense<0.000000e+00> : vector<2x96xf32>
      %80 = tpu.matmul %77, %78, %cst_64 {dimension_numbers = #tpu.dot_dimension_numbers<[1], [0], [0], [1], [0, 0, 1, 1], [], []>} : vector<2x32xf32>, vector<32x96xf32>, vector<2x96xf32> -> vector<2x96xf32>
      %81 = vector.broadcast %79 : vector<1x96xf32> to vector<2x96xf32>
      %82 = arith.addf %80, %81 : vector<2x96xf32>
      %83 = vector.extract_strided_slice %75 {offsets = [0, 0], sizes = [2, 32], strides = [1, 1]} : vector<2x96xf32> to vector<2x32xf32>
      %84 = vector.extract_strided_slice %82 {offsets = [0, 0], sizes = [2, 32], strides = [1, 1]} : vector<2x96xf32> to vector<2x32xf32>
      %85 = arith.addf %83, %84 : vector<2x32xf32>
      %86 = arith.negf %85 : vector<2x32xf32>
      %87 = math.exp %86 : vector<2x32xf32>
      %cst_65 = arith.constant 1.000000e+00 : f32
      %88 = vector.broadcast %cst_65 : f32 to vector<2x32xf32>
      %89 = arith.addf %88, %87 : vector<2x32xf32>
      %90 = arith.divf %88, %89 : vector<2x32xf32>
      %91 = vector.extract_strided_slice %75 {offsets = [0, 32], sizes = [2, 32], strides = [1, 1]} : vector<2x96xf32> to vector<2x32xf32>
      %92 = vector.extract_strided_slice %82 {offsets = [0, 32], sizes = [2, 32], strides = [1, 1]} : vector<2x96xf32> to vector<2x32xf32>
      %93 = arith.addf %91, %92 : vector<2x32xf32>
      %94 = arith.negf %93 : vector<2x32xf32>
      %95 = math.exp %94 : vector<2x32xf32>
      %cst_66 = arith.constant 1.000000e+00 : f32
      %96 = vector.broadcast %cst_66 : f32 to vector<2x32xf32>
      %97 = arith.addf %96, %95 : vector<2x32xf32>
      %98 = arith.divf %96, %97 : vector<2x32xf32>
      %99 = vector.extract_strided_slice %75 {offsets = [0, 64], sizes = [2, 32], strides = [1, 1]} : vector<2x96xf32> to vector<2x32xf32>
      %100 = vector.extract_strided_slice %82 {offsets = [0, 64], sizes = [2, 32], strides = [1, 1]} : vector<2x96xf32> to vector<2x32xf32>
      %101 = arith.mulf %90, %100 : vector<2x32xf32>
      %102 = arith.addf %99, %101 : vector<2x32xf32>
      %103 = math.tanh %102 : vector<2x32xf32>
      %cst_67 = arith.constant 1.000000e+00 : f32
      %104 = vector.broadcast %cst_67 : f32 to vector<2x32xf32>
      %105 = arith.subf %104, %98 : vector<2x32xf32>
      %106 = arith.mulf %105, %103 : vector<2x32xf32>
      %107 = arith.mulf %98, %77 : vector<2x32xf32>
      %108 = arith.addf %106, %107 : vector<2x32xf32>
      %c0_68 = arith.constant 0 : index
      %c0_69 = arith.constant 0 : index
      %109 = vector.load %arg13[%c0_68, %c0_69] : memref<32x96xf32, #tpu.memory_space<vmem>>, vector<32x96xf32>
      %cst_70 = arith.constant dense<0.000000e+00> : vector<2x96xf32>
      %110 = tpu.matmul %56, %109, %cst_70 {dimension_numbers = #tpu.dot_dimension_numbers<[1], [0], [0], [1], [0, 0, 1, 1], [], []>} : vector<2x32xf32>, vector<32x96xf32>, vector<2x96xf32> -> vector<2x96xf32>
      %c0_71 = arith.constant 0 : index
      %c0_72 = arith.constant 0 : index
      %111 = vector.load %arg14[%c0_71, %c0_72] : memref<32x96xf32, #tpu.memory_space<vmem>>, vector<32x96xf32>
      %cst_73 = arith.constant dense<0.000000e+00> : vector<2x96xf32>
      %112 = tpu.matmul %55, %111, %cst_73 {dimension_numbers = #tpu.dot_dimension_numbers<[1], [0], [0], [1], [0, 0, 1, 1], [], []>} : vector<2x32xf32>, vector<32x96xf32>, vector<2x96xf32> -> vector<2x96xf32>
      %113 = arith.addf %110, %112 : vector<2x96xf32>
      %c0_74 = arith.constant 0 : index
      %c0_75 = arith.constant 0 : index
      %114 = vector.load %arg16[%c0_74, %c0_75] : memref<1x96xf32, #tpu.memory_space<vmem>>, vector<1x96xf32>
      %115 = vector.broadcast %114 : vector<1x96xf32> to vector<2x96xf32>
      %116 = arith.addf %113, %115 : vector<2x96xf32>
      %c0_76 = arith.constant 0 : index
      %c0_77 = arith.constant 0 : index
      %117 = vector.load %arg15[%c0_76, %c0_77] : memref<32x96xf32, #tpu.memory_space<vmem>>, vector<32x96xf32>
      %c0_78 = arith.constant 0 : index
      %c0_79 = arith.constant 0 : index
      %118 = vector.load %arg17[%c0_78, %c0_79] : memref<1x96xf32, #tpu.memory_space<vmem>>, vector<1x96xf32>
      %cst_80 = arith.constant dense<0.000000e+00> : vector<2x96xf32>
      %119 = tpu.matmul %67, %117, %cst_80 {dimension_numbers = #tpu.dot_dimension_numbers<[1], [0], [0], [1], [0, 0, 1, 1], [], []>} : vector<2x32xf32>, vector<32x96xf32>, vector<2x96xf32> -> vector<2x96xf32>
      %120 = vector.broadcast %118 : vector<1x96xf32> to vector<2x96xf32>
      %121 = arith.addf %119, %120 : vector<2x96xf32>
      %122 = vector.extract_strided_slice %116 {offsets = [0, 0], sizes = [2, 32], strides = [1, 1]} : vector<2x96xf32> to vector<2x32xf32>
      %123 = vector.extract_strided_slice %121 {offsets = [0, 0], sizes = [2, 32], strides = [1, 1]} : vector<2x96xf32> to vector<2x32xf32>
      %124 = arith.addf %122, %123 : vector<2x32xf32>
      %125 = arith.negf %124 : vector<2x32xf32>
      %126 = math.exp %125 : vector<2x32xf32>
      %cst_81 = arith.constant 1.000000e+00 : f32
      %127 = vector.broadcast %cst_81 : f32 to vector<2x32xf32>
      %128 = arith.addf %127, %126 : vector<2x32xf32>
      %129 = arith.divf %127, %128 : vector<2x32xf32>
      %130 = vector.extract_strided_slice %116 {offsets = [0, 32], sizes = [2, 32], strides = [1, 1]} : vector<2x96xf32> to vector<2x32xf32>
      %131 = vector.extract_strided_slice %121 {offsets = [0, 32], sizes = [2, 32], strides = [1, 1]} : vector<2x96xf32> to vector<2x32xf32>
      %132 = arith.addf %130, %131 : vector<2x32xf32>
      %133 = arith.negf %132 : vector<2x32xf32>
      %134 = math.exp %133 : vector<2x32xf32>
      %cst_82 = arith.constant 1.000000e+00 : f32
      %135 = vector.broadcast %cst_82 : f32 to vector<2x32xf32>
      %136 = arith.addf %135, %134 : vector<2x32xf32>
      %137 = arith.divf %135, %136 : vector<2x32xf32>
      %138 = vector.extract_strided_slice %116 {offsets = [0, 64], sizes = [2, 32], strides = [1, 1]} : vector<2x96xf32> to vector<2x32xf32>
      %139 = vector.extract_strided_slice %121 {offsets = [0, 64], sizes = [2, 32], strides = [1, 1]} : vector<2x96xf32> to vector<2x32xf32>
      %140 = arith.mulf %129, %139 : vector<2x32xf32>
      %141 = arith.addf %138, %140 : vector<2x32xf32>
      %142 = math.tanh %141 : vector<2x32xf32>
      %cst_83 = arith.constant 1.000000e+00 : f32
      %143 = vector.broadcast %cst_83 : f32 to vector<2x32xf32>
      %144 = arith.subf %143, %137 : vector<2x32xf32>
      %145 = arith.mulf %144, %142 : vector<2x32xf32>
      %146 = arith.mulf %137, %67 : vector<2x32xf32>
      %147 = arith.addf %145, %146 : vector<2x32xf32>
      %c0_84 = arith.constant 0 : index
      %c0_85 = arith.constant 0 : index
      %148 = vector.load %arg4[%c0_84, %c0_85] : memref<2x64xf32, #tpu.memory_space<vmem>>, vector<2x64xf32>
      %149 = tpu.concatenate %147, %147 in 1 : vector<2x32xf32>, vector<2x32xf32> -> vector<2x64xf32>
      %cst_86 = arith.constant 1.000000e+00 : f32
      %150 = vector.broadcast %cst_86 : f32 to vector<2x64xf32>
      %151 = arith.subf %150, %148 : vector<2x64xf32>
      %152 = arith.mulf %58, %151 : vector<2x64xf32>
      %153 = arith.mulf %149, %148 : vector<2x64xf32>
      %154 = arith.addf %152, %153 : vector<2x64xf32>
      %c0_87 = arith.constant 0 : index
      %c0_88 = arith.constant 0 : index
      %155 = vector.load %arg24[%c0_87, %c0_88] : memref<2x64xf32, #tpu.memory_space<vmem>>, vector<2x64xf32>
      tpu.vector_store %arg24[%c0_87, %c0_88], %154 {strides = array<i32>} : memref<2x64xf32, #tpu.memory_space<vmem>>, vector<2x64xf32>,
      %c0_89 = arith.constant 0 : index
      %c0_90 = arith.constant 0 : index
      %156 = vector.load %arg18[%c0_89, %c0_90] : memref<32x96xf32, #tpu.memory_space<vmem>>, vector<32x96xf32>
      %cst_91 = arith.constant dense<0.000000e+00> : vector<2x96xf32>
      %157 = tpu.matmul %147, %156, %cst_91 {dimension_numbers = #tpu.dot_dimension_numbers<[1], [0], [0], [1], [0, 0, 1, 1], [], []>} : vector<2x32xf32>, vector<32x96xf32>, vector<2x96xf32> -> vector<2x96xf32>
      %c0_92 = arith.constant 0 : index
      %c0_93 = arith.constant 0 : index
      %158 = vector.load %arg20[%c0_92, %c0_93] : memref<1x96xf32, #tpu.memory_space<vmem>>, vector<1x96xf32>
      %159 = vector.broadcast %158 : vector<1x96xf32> to vector<2x96xf32>
      %160 = arith.addf %157, %159 : vector<2x96xf32>
      %c0_94 = arith.constant 0 : index
      %c0_95 = arith.constant 0 : index
      %161 = vector.load %arg7[%c0_94, %c0_95] : memref<2x32xf32, #tpu.memory_space<vmem>>, vector<2x32xf32>
      %c0_96 = arith.constant 0 : index
      %c0_97 = arith.constant 0 : index
      %162 = vector.load %arg19[%c0_96, %c0_97] : memref<32x96xf32, #tpu.memory_space<vmem>>, vector<32x96xf32>
      %c0_98 = arith.constant 0 : index
      %c0_99 = arith.constant 0 : index
      %163 = vector.load %arg21[%c0_98, %c0_99] : memref<1x96xf32, #tpu.memory_space<vmem>>, vector<1x96xf32>
      %cst_100 = arith.constant dense<0.000000e+00> : vector<2x96xf32>
      %164 = tpu.matmul %161, %162, %cst_100 {dimension_numbers = #tpu.dot_dimension_numbers<[1], [0], [0], [1], [0, 0, 1, 1], [], []>} : vector<2x32xf32>, vector<32x96xf32>, vector<2x96xf32> -> vector<2x96xf32>
      %165 = vector.broadcast %163 : vector<1x96xf32> to vector<2x96xf32>
      %166 = arith.addf %164, %165 : vector<2x96xf32>
      %167 = vector.extract_strided_slice %160 {offsets = [0, 0], sizes = [2, 32], strides = [1, 1]} : vector<2x96xf32> to vector<2x32xf32>
      %168 = vector.extract_strided_slice %166 {offsets = [0, 0], sizes = [2, 32], strides = [1, 1]} : vector<2x96xf32> to vector<2x32xf32>
      %169 = arith.addf %167, %168 : vector<2x32xf32>
      %170 = arith.negf %169 : vector<2x32xf32>
      %171 = math.exp %170 : vector<2x32xf32>
      %cst_101 = arith.constant 1.000000e+00 : f32
      %172 = vector.broadcast %cst_101 : f32 to vector<2x32xf32>
      %173 = arith.addf %172, %171 : vector<2x32xf32>
      %174 = arith.divf %172, %173 : vector<2x32xf32>
      %175 = vector.extract_strided_slice %160 {offsets = [0, 32], sizes = [2, 32], strides = [1, 1]} : vector<2x96xf32> to vector<2x32xf32>
      %176 = vector.extract_strided_slice %166 {offsets = [0, 32], sizes = [2, 32], strides = [1, 1]} : vector<2x96xf32> to vector<2x32xf32>
      %177 = arith.addf %175, %176 : vector<2x32xf32>
      %178 = arith.negf %177 : vector<2x32xf32>
      %179 = math.exp %178 : vector<2x32xf32>
      %cst_102 = arith.constant 1.000000e+00 : f32
      %180 = vector.broadcast %cst_102 : f32 to vector<2x32xf32>
      %181 = arith.addf %180, %179 : vector<2x32xf32>
      %182 = arith.divf %180, %181 : vector<2x32xf32>
      %183 = vector.extract_strided_slice %160 {offsets = [0, 64], sizes = [2, 32], strides = [1, 1]} : vector<2x96xf32> to vector<2x32xf32>
      %184 = vector.extract_strided_slice %166 {offsets = [0, 64], sizes = [2, 32], strides = [1, 1]} : vector<2x96xf32> to vector<2x32xf32>
      %185 = arith.mulf %174, %184 : vector<2x32xf32>
      %186 = arith.addf %183, %185 : vector<2x32xf32>
      %187 = math.tanh %186 : vector<2x32xf32>
      %cst_103 = arith.constant 1.000000e+00 : f32
      %188 = vector.broadcast %cst_103 : f32 to vector<2x32xf32>
      %189 = arith.subf %188, %182 : vector<2x32xf32>
      %190 = arith.mulf %189, %187 : vector<2x32xf32>
      %191 = arith.mulf %182, %161 : vector<2x32xf32>
      %192 = arith.addf %190, %191 : vector<2x32xf32>
      %193 = tpu.concatenate %108, %192 in 1 : vector<2x32xf32>, vector<2x32xf32> -> vector<2x64xf32>
      %c0_104 = arith.constant 0 : index
      %c0_105 = arith.constant 0 : index
      %194 = vector.load %arg23[%c0_104, %c0_105] : memref<2x64xf32, #tpu.memory_space<vmem>>, vector<2x64xf32>
      tpu.vector_store %arg23[%c0_104, %c0_105], %193 {strides = array<i32>} : memref<2x64xf32, #tpu.memory_space<vmem>>, vector<2x64xf32>,
    } else {
    }
    return
  }
  func.func @transform_0(%arg0: i32, %arg1: i32) -> (i32, i32) {
    %c0_i32 = arith.constant 0 : i32
    %c0_i32_0 = arith.constant 0 : i32
    return %arg0, %c0_i32 : i32, i32
  }
  func.func @transform_1(%arg0: i32, %arg1: i32) -> (i32, i32) {
    %c0_i32 = arith.constant 0 : i32
    %c0_i32_0 = arith.constant 0 : i32
    return %arg0, %c0_i32 : i32, i32
  }
  func.func @transform_2(%arg0: i32, %arg1: i32) -> (i32, i32) {
    %c0_i32 = arith.constant 0 : i32
    %c0_i32_0 = arith.constant 0 : i32
    return %arg0, %c0_i32 : i32, i32
  }
  func.func @transform_3(%arg0: i32, %arg1: i32) -> (i32, i32, i32) {
    %c0_i32 = arith.constant 0 : i32
    %c0_i32_0 = arith.constant 0 : i32
    return %arg1, %arg0, %c0_i32 : i32, i32, i32
  }
  func.func @transform_4(%arg0: i32, %arg1: i32) -> (i32, i32) {
    %c0_i32 = arith.constant 0 : i32
    %c0_i32_0 = arith.constant 0 : i32
    return %arg0, %c0_i32 : i32, i32
  }
  func.func @transform_5(%arg0: i32, %arg1: i32) -> (i32, i32) {
    %c0_i32 = arith.constant 0 : i32
    %c0_i32_0 = arith.constant 0 : i32
    return %arg0, %c0_i32 : i32, i32
  }
  func.func @transform_6(%arg0: i32, %arg1: i32) -> (i32, i32) {
    %c0_i32 = arith.constant 0 : i32
    %c0_i32_0 = arith.constant 0 : i32
    %c0_i32_1 = arith.constant 0 : i32
    return %c0_i32, %c0_i32_0 : i32, i32
  }
  func.func @transform_7(%arg0: i32, %arg1: i32) -> (i32, i32) {
    %c0_i32 = arith.constant 0 : i32
    %c0_i32_0 = arith.constant 0 : i32
    %c0_i32_1 = arith.constant 0 : i32
    return %c0_i32, %c0_i32_0 : i32, i32
  }
  func.func @transform_8(%arg0: i32, %arg1: i32) -> (i32, i32) {
    %c0_i32 = arith.constant 0 : i32
    %c0_i32_0 = arith.constant 0 : i32
    %c0_i32_1 = arith.constant 0 : i32
    return %c0_i32, %c0_i32_0 : i32, i32
  }
  func.func @transform_9(%arg0: i32, %arg1: i32) -> (i32, i32) {
    %c0_i32 = arith.constant 0 : i32
    %c0_i32_0 = arith.constant 0 : i32
    %c0_i32_1 = arith.constant 0 : i32
    return %c0_i32, %c0_i32_0 : i32, i32
  }
  func.func @transform_10(%arg0: i32, %arg1: i32) -> (i32, i32) {
    %c0_i32 = arith.constant 0 : i32
    %c0_i32_0 = arith.constant 0 : i32
    %c0_i32_1 = arith.constant 0 : i32
    return %c0_i32, %c0_i32_0 : i32, i32
  }
  func.func @transform_11(%arg0: i32, %arg1: i32) -> (i32, i32) {
    %c0_i32 = arith.constant 0 : i32
    %c0_i32_0 = arith.constant 0 : i32
    %c0_i32_1 = arith.constant 0 : i32
    return %c0_i32, %c0_i32_0 : i32, i32
  }
  func.func @transform_12(%arg0: i32, %arg1: i32) -> (i32, i32) {
    %c0_i32 = arith.constant 0 : i32
    %c0_i32_0 = arith.constant 0 : i32
    %c0_i32_1 = arith.constant 0 : i32
    return %c0_i32, %c0_i32_0 : i32, i32
  }
  func.func @transform_13(%arg0: i32, %arg1: i32) -> (i32, i32) {
    %c0_i32 = arith.constant 0 : i32
    %c0_i32_0 = arith.constant 0 : i32
    %c0_i32_1 = arith.constant 0 : i32
    return %c0_i32, %c0_i32_0 : i32, i32
  }
  func.func @transform_14(%arg0: i32, %arg1: i32) -> (i32, i32) {
    %c0_i32 = arith.constant 0 : i32
    %c0_i32_0 = arith.constant 0 : i32
    %c0_i32_1 = arith.constant 0 : i32
    return %c0_i32, %c0_i32_0 : i32, i32
  }
  func.func @transform_15(%arg0: i32, %arg1: i32) -> (i32, i32) {
    %c0_i32 = arith.constant 0 : i32
    %c0_i32_0 = arith.constant 0 : i32
    %c0_i32_1 = arith.constant 0 : i32
    return %c0_i32, %c0_i32_0 : i32, i32
  }
  func.func @transform_16(%arg0: i32, %arg1: i32) -> (i32, i32) {
    %c0_i32 = arith.constant 0 : i32
    %c0_i32_0 = arith.constant 0 : i32
    %c0_i32_1 = arith.constant 0 : i32
    return %c0_i32, %c0_i32_0 : i32, i32
  }
  func.func @transform_17(%arg0: i32, %arg1: i32) -> (i32, i32) {
    %c0_i32 = arith.constant 0 : i32
    %c0_i32_0 = arith.constant 0 : i32
    %c0_i32_1 = arith.constant 0 : i32
    return %c0_i32, %c0_i32_0 : i32, i32
  }
  func.func @transform_18(%arg0: i32, %arg1: i32) -> (i32, i32) {
    %c0_i32 = arith.constant 0 : i32
    %c0_i32_0 = arith.constant 0 : i32
    %c0_i32_1 = arith.constant 0 : i32
    return %c0_i32, %c0_i32_0 : i32, i32
  }
  func.func @transform_19(%arg0: i32, %arg1: i32) -> (i32, i32) {
    %c0_i32 = arith.constant 0 : i32
    %c0_i32_0 = arith.constant 0 : i32
    %c0_i32_1 = arith.constant 0 : i32
    return %c0_i32, %c0_i32_0 : i32, i32
  }
  func.func @transform_20(%arg0: i32, %arg1: i32) -> (i32, i32) {
    %c0_i32 = arith.constant 0 : i32
    %c0_i32_0 = arith.constant 0 : i32
    %c0_i32_1 = arith.constant 0 : i32
    return %c0_i32, %c0_i32_0 : i32, i32
  }
  func.func @transform_21(%arg0: i32, %arg1: i32) -> (i32, i32) {
    %c0_i32 = arith.constant 0 : i32
    %c0_i32_0 = arith.constant 0 : i32
    return %arg0, %c0_i32 : i32, i32
  }
  func.func @transform_22(%arg0: i32, %arg1: i32) -> (i32, i32) {
    %c0_i32 = arith.constant 0 : i32
    %c0_i32_0 = arith.constant 0 : i32
    return %arg0, %c0_i32 : i32, i32
  }
  func.func @transform_23(%arg0: i32, %arg1: i32) -> (i32, i32, i32) {
    %c0_i32 = arith.constant 0 : i32
    %c0_i32_0 = arith.constant 0 : i32
    %c0_i32_1 = arith.constant 0 : i32
    return %c0_i32, %arg0, %c0_i32_0 : i32, i32, i32
  }
}

</mosaic_0001>

<llo_original>
// kernel: tpu_custom_call.1
$region0: #{tpu_custom_call.1}
  #allocation0 [shape = 'u32[]', space=smem, size = 0x4, offset = 0x4, fixed_abs, tag = 'smem constant byte address 0x4 - core index']
  #allocation1 [shape = 'u32[144,128]{1,0:T(1,128)}', space=vmem, size = 0x12000, scoped, tag = 'internal scratch']
  #allocation2 [shape = 'f32[1,2,1]{2,1,0:T(2,128)}', space=vmem, size = 0x400, scoped, tag = 'scratch operand']
  #allocation3 [shape = 'f32[1,2,1]{2,1,0:T(2,128)}', space=vmem, size = 0x400, scoped, tag = 'scratch operand']
  #allocation4 [shape = 'f32[1,2,32]{2,1,0:T(2,128)}', space=vmem, size = 0x400, scoped, tag = 'scratch operand']
  %s0 = inlined_call_operand.hbm [shape: f32[2,32], index: 0, kind: input, shape index: {}]
  %s1 = inlined_call_operand.hbm [shape: f32[2,2], index: 1, kind: input, shape index: {}]
  %s2 = inlined_call_operand.vmem [shape: f32[2,64], index: 2, kind: input, shape index: {}]
  %s3 = inlined_call_operand.hbm [shape: f32[4,2,32], index: 3, kind: input, shape index: {}]
  %s4 = inlined_call_operand.vmem [shape: f32[2,64], index: 4, kind: input, shape index: {}]
  %s5 = inlined_call_operand.vmem [shape: f32[2,32], index: 5, kind: input, shape index: {}]
  %s6 = inlined_call_operand.hbm [shape: f32[32,96], index: 6, kind: input, shape index: {}]
  %s7 = inlined_call_operand.hbm [shape: f32[32,96], index: 7, kind: input, shape index: {}]
  %s8 = inlined_call_operand.hbm [shape: f32[32,96], index: 8, kind: input, shape index: {}]
  %s9 = inlined_call_operand.vmem [shape: f32[1,96], index: 9, kind: input, shape index: {}]
  %s10 = inlined_call_operand.vmem [shape: f32[1,96], index: 10, kind: input, shape index: {}]
  %s11 = inlined_call_operand.hbm [shape: f32[32,96], index: 11, kind: input, shape index: {}]
  %s12 = inlined_call_operand.hbm [shape: f32[32,96], index: 12, kind: input, shape index: {}]
  %s13 = inlined_call_operand.hbm [shape: f32[32,96], index: 13, kind: input, shape index: {}]
  %s14 = inlined_call_operand.vmem [shape: f32[1,96], index: 14, kind: input, shape index: {}]
  %s15 = inlined_call_operand.vmem [shape: f32[1,96], index: 15, kind: input, shape index: {}]
  %s16 = inlined_call_operand.hbm [shape: f32[32,96], index: 16, kind: input, shape index: {}]
  %s17 = inlined_call_operand.hbm [shape: f32[32,96], index: 17, kind: input, shape index: {}]
  %s18 = inlined_call_operand.vmem [shape: f32[1,96], index: 18, kind: input, shape index: {}]
  %s19 = inlined_call_operand.vmem [shape: f32[1,96], index: 19, kind: input, shape index: {}]
  %s20 = inlined_call_operand.vmem [shape: f32[1,32], index: 20, kind: input, shape index: {}]
  %s21 = inlined_call_operand.hbm [shape: f32[2,64], index: 21, kind: output, shape index: {0}]
  %s22 = inlined_call_operand.hbm [shape: f32[2,64], index: 22, kind: output, shape index: {1}]
  %s23 = inlined_call_operand.vmem [shape: f32[4,2,1], index: 23, kind: output, shape index: {2}]
  %24 = xla_tuple %s21, %s22, %s23
  %s25 = sld [smem:[#allocation0]]
  $region185: #{tpu_custom_call.1} parent=0
    _
  %s27 = ssub.s32 1, %s25
  %s28 = scalar_select 0, %s27, %s25
  $region1: #{tpu_custom_call.1} parent=0
    #allocation5 [shape = 'u8[1024]{0}', space=vmem, size = 0x400, scoped, tag = 'input window, operand 0, single buffered']
    #allocation6 [shape = 's32[2]{0}', space=sflag, size = 0x8, scoped, tag = 'scoped memory for tpu_custom_call.1']
    #allocation7 [shape = 's32[2]{0}', space=sflag, size = 0x8, scoped, tag = 'scoped memory for tpu_custom_call.1']
    #allocation8 [shape = 'u8[1024]{0}', space=vmem, size = 0x400, scoped, tag = 'input window, operand 1, single buffered']
    #allocation9 [shape = 's32[1]{0}', space=sflag, size = 0x4, scoped, tag = 'scoped memory for tpu_custom_call.1']
    #allocation10 [shape = 'u8[4096]{0}', space=vmem, size = 0x1000, scoped, tag = 'input window, operand 3']
    #allocation11 [shape = 'u8[16384]{0}', space=vmem, size = 0x4000, scoped, tag = 'input window, operand 6, single buffered']
    #allocation12 [shape = 'u8[16384]{0}', space=vmem, size = 0x4000, scoped, tag = 'input window, operand 7, single buffered']
    #allocation13 [shape = 's32[1]{0}', space=sflag, size = 0x4, scoped, tag = 'scoped memory for tpu_custom_call.1']
    #allocation14 [shape = 'u8[16384]{0}', space=vmem, size = 0x4000, scoped, tag = 'input window, operand 8, single buffered']
    #allocation15 [shape = 'u8[16384]{0}', space=vmem, size = 0x4000, scoped, tag = 'input window, operand 11, single buffered']
    #allocation16 [shape = 's32[1]{0}', space=sflag, size = 0x4, scoped, tag = 'scoped memory for tpu_custom_call.1']
    #allocation17 [shape = 'u8[16384]{0}', space=vmem, size = 0x4000, scoped, tag = 'input window, operand 12, single buffered']
    #allocation18 [shape = 'u8[16384]{0}', space=vmem, size = 0x4000, scoped, tag = 'input window, operand 13, single buffered']
    #allocation19 [shape = 's32[1]{0}', space=sflag, size = 0x4, scoped, tag = 'scoped memory for tpu_custom_call.1']
    #allocation20 [shape = 'u8[16384]{0}', space=vmem, size = 0x4000, scoped, tag = 'input window, operand 16, single buffered']
    #allocation21 [shape = 'u8[16384]{0}', space=vmem, size = 0x4000, scoped, tag = 'input window, operand 17, single buffered']
    #allocation22 [shape = 's32[1]{0}', space=sflag, size = 0x4, scoped, tag = 'scoped memory for tpu_custom_call.1']
    #allocation23 [shape = 'u8[1024]{0}', space=vmem, size = 0x400, scoped, tag = 'output window, operand 0, single buffered']
    #allocation24 [shape = 'u8[1024]{0}', space=vmem, size = 0x400, scoped, tag = 'output window, operand 1, single buffered']
    #allocation25 [shape = 's32[1]{0}', space=sflag, size = 0x4, scoped, tag = 'scoped memory for tpu_custom_call.1']
    %29 = vsyncpa [#allocation6], 0
    %30 = vsyncpa [#allocation9], 0
    %31 = vsyncpa [#allocation13], 0
    %32 = vsyncpa [#allocation16], 0
    %33 = vsyncpa [#allocation19], 0
    %34 = vsyncpa [#allocation22], 0
    %35 = vsyncpa [#allocation7], 0
    %36 = vsyncpa [#allocation25], 0
    loop: start=0, step=1, limit=4
    $region2: #{tpu_custom_call.1} parent=1 // loop_pre_header
      _
    $region3: #{tpu_custom_call.1} parent=1 // loop_header
      %s38 = sphi 0, %s42
      %p39 = scmp.ge.s32.totalorder %s38, 4
      %s45 = sphi 0, %s57
      %s46 = sphi 0, %s53
      %s47 = sphi 0, %s45
      %s48 = sphi 0, %s46
      %s49 = sphi 0, %s47
      %s50 = sphi 0, %s48
      %s60 = sphi 0, %s62
      %s63 = sphi 0, %s60
      %s64 = sphi 0, %s63
      %s80 = sphi 0, %s64
      %s86 = sphi 0, %s88
      %s89 = sphi 0, %s86
      %s90 = sphi 0, %s89
      %s106 = sphi 0, %s90
      %s112 = sphi 0, %s114
      %s115 = sphi 0, %s112
      %s116 = sphi 0, %s115
      %s132 = sphi 0, %s116
      %s140 = sphi 0, %s142
      %s143 = sphi 0, %s140
      %s144 = sphi 0, %s143
      %s160 = sphi 0, %s144
      %s166 = sphi 0, %s168
      %s169 = sphi 0, %s166
      %s170 = sphi 0, %s169
      %s186 = sphi 0, %s170
      %s192 = sphi 0, %s194
      %s195 = sphi 0, %s192
      %s196 = sphi 0, %s195
      %s212 = sphi 0, %s196
      %s216 = sphi 0, %s216
      %s218 = sphi 0, %s216
      %s219 = sphi 0, %s218
      %s233 = sphi 0, %s219
      %s237 = sphi 0, %s237
      %s239 = sphi 0, %s237
      %s240 = sphi 0, %s239
      %s254 = sphi 0, %s240
      %s258 = sphi 0, %s258
      %s260 = sphi 0, %s258
      %s261 = sphi 0, %s260
      %s275 = sphi 0, %s261
      %s279 = sphi 0, %s279
      %s281 = sphi 0, %s279
      %s282 = sphi 0, %s281
      %s296 = sphi 0, %s282
      %s300 = sphi 0, %s300
      %s302 = sphi 0, %s300
      %s303 = sphi 0, %s302
      %s317 = sphi 0, %s303
      %s321 = sphi 0, %s321
      %s323 = sphi 0, %s321
      %s324 = sphi 0, %s323
      %s338 = sphi 0, %s324
      %s342 = sphi 0, %s342
      %s344 = sphi 0, %s342
      %s345 = sphi 0, %s344
      %s359 = sphi 0, %s345
      %s363 = sphi 0, %s363
      %s365 = sphi 0, %s363
      %s366 = sphi 0, %s365
      %s380 = sphi 0, %s366
      %s384 = sphi 0, %s384
      %s386 = sphi 0, %s384
      %s387 = sphi 0, %s386
      %s401 = sphi 0, %s387
      %s405 = sphi 0, %s405
      %s407 = sphi 0, %s405
      %s408 = sphi 0, %s407
      %s422 = sphi 0, %s408
      %s426 = sphi 0, %s426
      %s428 = sphi 0, %s426
      %s429 = sphi 0, %s428
      %s443 = sphi 0, %s429
      %s447 = sphi 0, %s447
      %s449 = sphi 0, %s447
      %s450 = sphi 0, %s449
      %s464 = sphi 0, %s450
      %s468 = sphi 0, %s468
      %s470 = sphi 0, %s468
      %s471 = sphi 0, %s470
      %s485 = sphi 0, %s471
      %s489 = sphi 0, %s489
      %s491 = sphi 0, %s489
      %s492 = sphi 0, %s491
      %s506 = sphi 0, %s492
      %s510 = sphi 0, %s510
      %s512 = sphi 0, %s510
      %s513 = sphi 0, %s512
      %s527 = sphi 0, %s513
      %s533 = sphi 0, %s535
      %s536 = sphi 0, %s533
      %s537 = sphi 0, %s536
      %s553 = sphi 0, %s537
      %s559 = sphi 0, %s561
      %s562 = sphi 0, %s559
      %s563 = sphi 0, %s562
      %s579 = sphi 0, %s563
      %s585 = sphi 0, %s587
      %s588 = sphi 0, %s585
      %s589 = sphi 0, %s588
      %s605 = sphi 0, %s589
    $region4: #{tpu_custom_call.1} parent=1 // loop_header_branch
      %41 = sbr.rel (%p39) target = $region8
    $region5: #{tpu_custom_call.1} parent=1 // loop_body
      %s43 = ssub.s32 %s38, 1
      %s44 = ssub.s32 %s38, 2
      %s51 = sadd.s32 1, %s46
      %p52 = scmp.ge.s32.totalorder %s51, 2
      %s53 = scalar_select %p52, 0, %s51
      %s54 = sadd.s32 1, %s45
      %s55 = scalar_select %p52, %s54, %s45
      %p56 = scmp.ge.s32.totalorder %s55, 1
      %s57 = scalar_select %p56, 0, %s55
      %s58 = ssub.s32 %s45, %s57
      %p59 = scmp.eq.s32.totalorder %s58, 0
      %s61 = sadd.s32 %s60, 1
      %s62 = scalar_select %p59, %s60, %s61
      %p65 = pneg %p59
      %p66 = scmp.eq.s32.totalorder %s38, 1
      %p67 = por %p65, %p66
      %p68 = scmp.ne.s32.totalorder %s60, %s63
      %p69 = scmp.eq.s32.totalorder %s38, 0
      %p70 = por %p68, %p69
      %p71 = scmp.ne.s32.totalorder %s60, %s63
      %p72 = scmp.eq.s32.totalorder %s43, 1
      %p73 = por %p71, %p72
      %p74 = scmp.ne.s32.totalorder %s63, %s64
      %p75 = scmp.eq.s32.totalorder %s43, 0
      %p76 = por %p74, %p75
      %p77 = scmp.ne.s32.totalorder %s63, %s64
      %p78 = scmp.eq.s32.totalorder %s44, 1
      %p79 = por %p77, %p78
      %p81 = scmp.ne.s32.totalorder %s64, %s80
      %p82 = scmp.eq.s32.totalorder %s44, 0
      %p83 = por %p81, %p82
      %s84 = ssub.s32 %s45, %s57
      %p85 = scmp.eq.s32.totalorder %s84, 0
      %s87 = sadd.s32 %s86, 1
      %s88 = scalar_select %p85, %s86, %s87
      %p91 = pneg %p85
      %p92 = scmp.eq.s32.totalorder %s38, 1
      %p93 = por %p91, %p92
      %p94 = scmp.ne.s32.totalorder %s86, %s89
      %p95 = scmp.eq.s32.totalorder %s38, 0
      %p96 = por %p94, %p95
      %p97 = scmp.ne.s32.totalorder %s86, %s89
      %p98 = scmp.eq.s32.totalorder %s43, 1
      %p99 = por %p97, %p98
      %p100 = scmp.ne.s32.totalorder %s89, %s90
      %p101 = scmp.eq.s32.totalorder %s43, 0
      %p102 = por %p100, %p101
      %p103 = scmp.ne.s32.totalorder %s89, %s90
      %p104 = scmp.eq.s32.totalorder %s44, 1
      %p105 = por %p103, %p104
      %p107 = scmp.ne.s32.totalorder %s90, %s106
      %p108 = scmp.eq.s32.totalorder %s44, 0
      %p109 = por %p107, %p108
      %s110 = ssub.s32 %s45, %s57
      %p111 = scmp.eq.s32.totalorder %s110, 0
      %s113 = sadd.s32 %s112, 1
      %s114 = scalar_select %p111, %s112, %s113
      %p117 = pneg %p111
      %p118 = scmp.eq.s32.totalorder %s38, 1
      %p119 = por %p117, %p118
      %p120 = scmp.ne.s32.totalorder %s112, %s115
      %p121 = scmp.eq.s32.totalorder %s38, 0
      %p122 = por %p120, %p121
      %p123 = scmp.ne.s32.totalorder %s112, %s115
      %p124 = scmp.eq.s32.totalorder %s43, 1
      %p125 = por %p123, %p124
      %p126 = scmp.ne.s32.totalorder %s115, %s116
      %p127 = scmp.eq.s32.totalorder %s43, 0
      %p128 = por %p126, %p127
      %p129 = scmp.ne.s32.totalorder %s115, %s116
      %p130 = scmp.eq.s32.totalorder %s44, 1
      %p131 = por %p129, %p130
      %p133 = scmp.ne.s32.totalorder %s116, %s132
      %p134 = scmp.eq.s32.totalorder %s44, 0
      %p135 = por %p133, %p134
      %s136 = ssub.s32 %s46, %s53
      %s137 = ssub.s32 %s45, %s57
      %s138 = sor.u32 %s136, %s137
      %p139 = scmp.eq.s32.totalorder %s138, 0
      %s141 = sadd.s32 %s140, 1
      %s142 = scalar_select %p139, %s140, %s141
      %p145 = pneg %p139
      %p146 = scmp.eq.s32.totalorder %s38, 1
      %p147 = por %p145, %p146
      %p148 = scmp.ne.s32.totalorder %s140, %s143
      %p149 = scmp.eq.s32.totalorder %s38, 0
      %p150 = por %p148, %p149
      %p151 = scmp.ne.s32.totalorder %s140, %s143
      %p152 = scmp.eq.s32.totalorder %s43, 1
      %p153 = por %p151, %p152
      %p154 = scmp.ne.s32.totalorder %s143, %s144
      %p155 = scmp.eq.s32.totalorder %s43, 0
      %p156 = por %p154, %p155
      %p157 = scmp.ne.s32.totalorder %s143, %s144
      %p158 = scmp.eq.s32.totalorder %s44, 1
      %p159 = por %p157, %p158
      %p161 = scmp.ne.s32.totalorder %s144, %s160
      %p162 = scmp.eq.s32.totalorder %s44, 0
      %p163 = por %p161, %p162
      %s164 = ssub.s32 %s45, %s57
      %p165 = scmp.eq.s32.totalorder %s164, 0
      %s167 = sadd.s32 %s166, 1
      %s168 = scalar_select %p165, %s166, %s167
      %p171 = pneg %p165
      %p172 = scmp.eq.s32.totalorder %s38, 1
      %p173 = por %p171, %p172
      %p174 = scmp.ne.s32.totalorder %s166, %s169
      %p175 = scmp.eq.s32.totalorder %s38, 0
      %p176 = por %p174, %p175
      %p177 = scmp.ne.s32.totalorder %s166, %s169
      %p178 = scmp.eq.s32.totalorder %s43, 1
      %p179 = por %p177, %p178
      %p180 = scmp.ne.s32.totalorder %s169, %s170
      %p181 = scmp.eq.s32.totalorder %s43, 0
      %p182 = por %p180, %p181
      %p183 = scmp.ne.s32.totalorder %s169, %s170
      %p184 = scmp.eq.s32.totalorder %s44, 1
      %p185 = por %p183, %p184
      %p187 = scmp.ne.s32.totalorder %s170, %s186
      %p188 = scmp.eq.s32.totalorder %s44, 0
      %p189 = por %p187, %p188
      %s190 = ssub.s32 %s45, %s57
      %p191 = scmp.eq.s32.totalorder %s190, 0
      %s193 = sadd.s32 %s192, 1
      %s194 = scalar_select %p191, %s192, %s193
      %p197 = pneg %p191
      %p198 = scmp.eq.s32.totalorder %s38, 1
      %p199 = por %p197, %p198
      %p200 = scmp.ne.s32.totalorder %s192, %s195
      %p201 = scmp.eq.s32.totalorder %s38, 0
      %p202 = por %p200, %p201
      %p203 = scmp.ne.s32.totalorder %s192, %s195
      %p204 = scmp.eq.s32.totalorder %s43, 1
      %p205 = por %p203, %p204
      %p206 = scmp.ne.s32.totalorder %s195, %s196
      %p207 = scmp.eq.s32.totalorder %s43, 0
      %p208 = por %p206, %p207
      %p209 = scmp.ne.s32.totalorder %s195, %s196
      %p210 = scmp.eq.s32.totalorder %s44, 1
      %p211 = por %p209, %p210
      %p213 = scmp.ne.s32.totalorder %s196, %s212
      %p214 = scmp.eq.s32.totalorder %s44, 0
      %p215 = por %p213, %p214
      %s217 = sadd.s32 %s216, 1
      %p220 = scmp.eq.s32.totalorder %s38, 1
      %p221 = scmp.ne.s32.totalorder %s216, %s218
      %p222 = scmp.eq.s32.totalorder %s38, 0
      %p223 = por %p221, %p222
      %p224 = scmp.ne.s32.totalorder %s216, %s218
      %p225 = scmp.eq.s32.totalorder %s43, 1
      %p226 = por %p224, %p225
      %p227 = scmp.ne.s32.totalorder %s218, %s219
      %p228 = scmp.eq.s32.totalorder %s43, 0
      %p229 = por %p227, %p228
      %p230 = scmp.ne.s32.totalorder %s218, %s219
      %p231 = scmp.eq.s32.totalorder %s44, 1
      %p232 = por %p230, %p231
      %p234 = scmp.ne.s32.totalorder %s219, %s233
      %p235 = scmp.eq.s32.totalorder %s44, 0
      %p236 = por %p234, %p235
      %s238 = sadd.s32 %s237, 1
      %p241 = scmp.eq.s32.totalorder %s38, 1
      %p242 = scmp.ne.s32.totalorder %s237, %s239
      %p243 = scmp.eq.s32.totalorder %s38, 0
      %p244 = por %p242, %p243
      %p245 = scmp.ne.s32.totalorder %s237, %s239
      %p246 = scmp.eq.s32.totalorder %s43, 1
      %p247 = por %p245, %p246
      %p248 = scmp.ne.s32.totalorder %s239, %s240
      %p249 = scmp.eq.s32.totalorder %s43, 0
      %p250 = por %p248, %p249
      %p251 = scmp.ne.s32.totalorder %s239, %s240
      %p252 = scmp.eq.s32.totalorder %s44, 1
      %p253 = por %p251, %p252
      %p255 = scmp.ne.s32.totalorder %s240, %s254
      %p256 = scmp.eq.s32.totalorder %s44, 0
      %p257 = por %p255, %p256
      %s259 = sadd.s32 %s258, 1
      %p262 = scmp.eq.s32.totalorder %s38, 1
      %p263 = scmp.ne.s32.totalorder %s258, %s260
      %p264 = scmp.eq.s32.totalorder %s38, 0
      %p265 = por %p263, %p264
      %p266 = scmp.ne.s32.totalorder %s258, %s260
      %p267 = scmp.eq.s32.totalorder %s43, 1
      %p268 = por %p266, %p267
      %p269 = scmp.ne.s32.totalorder %s260, %s261
      %p270 = scmp.eq.s32.totalorder %s43, 0
      %p271 = por %p269, %p270
      %p272 = scmp.ne.s32.totalorder %s260, %s261
      %p273 = scmp.eq.s32.totalorder %s44, 1
      %p274 = por %p272, %p273
      %p276 = scmp.ne.s32.totalorder %s261, %s275
      %p277 = scmp.eq.s32.totalorder %s44, 0
      %p278 = por %p276, %p277
      %s280 = sadd.s32 %s279, 1
      %p283 = scmp.eq.s32.totalorder %s38, 1
      %p284 = scmp.ne.s32.totalorder %s279, %s281
      %p285 = scmp.eq.s32.totalorder %s38, 0
      %p286 = por %p284, %p285
      %p287 = scmp.ne.s32.totalorder %s279, %s281
      %p288 = scmp.eq.s32.totalorder %s43, 1
      %p289 = por %p287, %p288
      %p290 = scmp.ne.s32.totalorder %s281, %s282
      %p291 = scmp.eq.s32.totalorder %s43, 0
      %p292 = por %p290, %p291
      %p293 = scmp.ne.s32.totalorder %s281, %s282
      %p294 = scmp.eq.s32.totalorder %s44, 1
      %p295 = por %p293, %p294
      %p297 = scmp.ne.s32.totalorder %s282, %s296
      %p298 = scmp.eq.s32.totalorder %s44, 0
      %p299 = por %p297, %p298
      %s301 = sadd.s32 %s300, 1
      %p304 = scmp.eq.s32.totalorder %s38, 1
      %p305 = scmp.ne.s32.totalorder %s300, %s302
      %p306 = scmp.eq.s32.totalorder %s38, 0
      %p307 = por %p305, %p306
      %p308 = scmp.ne.s32.totalorder %s300, %s302
      %p309 = scmp.eq.s32.totalorder %s43, 1
      %p310 = por %p308, %p309
      %p311 = scmp.ne.s32.totalorder %s302, %s303
      %p312 = scmp.eq.s32.totalorder %s43, 0
      %p313 = por %p311, %p312
      %p314 = scmp.ne.s32.totalorder %s302, %s303
      %p315 = scmp.eq.s32.totalorder %s44, 1
      %p316 = por %p314, %p315
      %p318 = scmp.ne.s32.totalorder %s303, %s317
      %p319 = scmp.eq.s32.totalorder %s44, 0
      %p320 = por %p318, %p319
      %s322 = sadd.s32 %s321, 1
      %p325 = scmp.eq.s32.totalorder %s38, 1
      %p326 = scmp.ne.s32.totalorder %s321, %s323
      %p327 = scmp.eq.s32.totalorder %s38, 0
      %p328 = por %p326, %p327
      %p329 = scmp.ne.s32.totalorder %s321, %s323
      %p330 = scmp.eq.s32.totalorder %s43, 1
      %p331 = por %p329, %p330
      %p332 = scmp.ne.s32.totalorder %s323, %s324
      %p333 = scmp.eq.s32.totalorder %s43, 0
      %p334 = por %p332, %p333
      %p335 = scmp.ne.s32.totalorder %s323, %s324
      %p336 = scmp.eq.s32.totalorder %s44, 1
      %p337 = por %p335, %p336
      %p339 = scmp.ne.s32.totalorder %s324, %s338
      %p340 = scmp.eq.s32.totalorder %s44, 0
      %p341 = por %p339, %p340
      %s343 = sadd.s32 %s342, 1
      %p346 = scmp.eq.s32.totalorder %s38, 1
      %p347 = scmp.ne.s32.totalorder %s342, %s344
      %p348 = scmp.eq.s32.totalorder %s38, 0
      %p349 = por %p347, %p348
      %p350 = scmp.ne.s32.totalorder %s342, %s344
      %p351 = scmp.eq.s32.totalorder %s43, 1
      %p352 = por %p350, %p351
      %p353 = scmp.ne.s32.totalorder %s344, %s345
      %p354 = scmp.eq.s32.totalorder %s43, 0
      %p355 = por %p353, %p354
      %p356 = scmp.ne.s32.totalorder %s344, %s345
      %p357 = scmp.eq.s32.totalorder %s44, 1
      %p358 = por %p356, %p357
      %p360 = scmp.ne.s32.totalorder %s345, %s359
      %p361 = scmp.eq.s32.totalorder %s44, 0
      %p362 = por %p360, %p361
      %s364 = sadd.s32 %s363, 1
      %p367 = scmp.eq.s32.totalorder %s38, 1
      %p368 = scmp.ne.s32.totalorder %s363, %s365
      %p369 = scmp.eq.s32.totalorder %s38, 0
      %p370 = por %p368, %p369
      %p371 = scmp.ne.s32.totalorder %s363, %s365
      %p372 = scmp.eq.s32.totalorder %s43, 1
      %p373 = por %p371, %p372
      %p374 = scmp.ne.s32.totalorder %s365, %s366
      %p375 = scmp.eq.s32.totalorder %s43, 0
      %p376 = por %p374, %p375
      %p377 = scmp.ne.s32.totalorder %s365, %s366
      %p378 = scmp.eq.s32.totalorder %s44, 1
      %p379 = por %p377, %p378
      %p381 = scmp.ne.s32.totalorder %s366, %s380
      %p382 = scmp.eq.s32.totalorder %s44, 0
      %p383 = por %p381, %p382
      %s385 = sadd.s32 %s384, 1
      %p388 = scmp.eq.s32.totalorder %s38, 1
      %p389 = scmp.ne.s32.totalorder %s384, %s386
      %p390 = scmp.eq.s32.totalorder %s38, 0
      %p391 = por %p389, %p390
      %p392 = scmp.ne.s32.totalorder %s384, %s386
      %p393 = scmp.eq.s32.totalorder %s43, 1
      %p394 = por %p392, %p393
      %p395 = scmp.ne.s32.totalorder %s386, %s387
      %p396 = scmp.eq.s32.totalorder %s43, 0
      %p397 = por %p395, %p396
      %p398 = scmp.ne.s32.totalorder %s386, %s387
      %p399 = scmp.eq.s32.totalorder %s44, 1
      %p400 = por %p398, %p399
      %p402 = scmp.ne.s32.totalorder %s387, %s401
      %p403 = scmp.eq.s32.totalorder %s44, 0
      %p404 = por %p402, %p403
      %s406 = sadd.s32 %s405, 1
      %p409 = scmp.eq.s32.totalorder %s38, 1
      %p410 = scmp.ne.s32.totalorder %s405, %s407
      %p411 = scmp.eq.s32.totalorder %s38, 0
      %p412 = por %p410, %p411
      %p413 = scmp.ne.s32.totalorder %s405, %s407
      %p414 = scmp.eq.s32.totalorder %s43, 1
      %p415 = por %p413, %p414
      %p416 = scmp.ne.s32.totalorder %s407, %s408
      %p417 = scmp.eq.s32.totalorder %s43, 0
      %p418 = por %p416, %p417
      %p419 = scmp.ne.s32.totalorder %s407, %s408
      %p420 = scmp.eq.s32.totalorder %s44, 1
      %p421 = por %p419, %p420
      %p423 = scmp.ne.s32.totalorder %s408, %s422
      %p424 = scmp.eq.s32.totalorder %s44, 0
      %p425 = por %p423, %p424
      %s427 = sadd.s32 %s426, 1
      %p430 = scmp.eq.s32.totalorder %s38, 1
      %p431 = scmp.ne.s32.totalorder %s426, %s428
      %p432 = scmp.eq.s32.totalorder %s38, 0
      %p433 = por %p431, %p432
      %p434 = scmp.ne.s32.totalorder %s426, %s428
      %p435 = scmp.eq.s32.totalorder %s43, 1
      %p436 = por %p434, %p435
      %p437 = scmp.ne.s32.totalorder %s428, %s429
      %p438 = scmp.eq.s32.totalorder %s43, 0
      %p439 = por %p437, %p438
      %p440 = scmp.ne.s32.totalorder %s428, %s429
      %p441 = scmp.eq.s32.totalorder %s44, 1
      %p442 = por %p440, %p441
      %p444 = scmp.ne.s32.totalorder %s429, %s443
      %p445 = scmp.eq.s32.totalorder %s44, 0
      %p446 = por %p444, %p445
      %s448 = sadd.s32 %s447, 1
      %p451 = scmp.eq.s32.totalorder %s38, 1
      %p452 = scmp.ne.s32.totalorder %s447, %s449
      %p453 = scmp.eq.s32.totalorder %s38, 0
      %p454 = por %p452, %p453
      %p455 = scmp.ne.s32.totalorder %s447, %s449
      %p456 = scmp.eq.s32.totalorder %s43, 1
      %p457 = por %p455, %p456
      %p458 = scmp.ne.s32.totalorder %s449, %s450
      %p459 = scmp.eq.s32.totalorder %s43, 0
      %p460 = por %p458, %p459
      %p461 = scmp.ne.s32.totalorder %s449, %s450
      %p462 = scmp.eq.s32.totalorder %s44, 1
      %p463 = por %p461, %p462
      %p465 = scmp.ne.s32.totalorder %s450, %s464
      %p466 = scmp.eq.s32.totalorder %s44, 0
      %p467 = por %p465, %p466
      %s469 = sadd.s32 %s468, 1
      %p472 = scmp.eq.s32.totalorder %s38, 1
      %p473 = scmp.ne.s32.totalorder %s468, %s470
      %p474 = scmp.eq.s32.totalorder %s38, 0
      %p475 = por %p473, %p474
      %p476 = scmp.ne.s32.totalorder %s468, %s470
      %p477 = scmp.eq.s32.totalorder %s43, 1
      %p478 = por %p476, %p477
      %p479 = scmp.ne.s32.totalorder %s470, %s471
      %p480 = scmp.eq.s32.totalorder %s43, 0
      %p481 = por %p479, %p480
      %p482 = scmp.ne.s32.totalorder %s470, %s471
      %p483 = scmp.eq.s32.totalorder %s44, 1
      %p484 = por %p482, %p483
      %p486 = scmp.ne.s32.totalorder %s471, %s485
      %p487 = scmp.eq.s32.totalorder %s44, 0
      %p488 = por %p486, %p487
      %s490 = sadd.s32 %s489, 1
      %p493 = scmp.eq.s32.totalorder %s38, 1
      %p494 = scmp.ne.s32.totalorder %s489, %s491
      %p495 = scmp.eq.s32.totalorder %s38, 0
      %p496 = por %p494, %p495
      %p497 = scmp.ne.s32.totalorder %s489, %s491
      %p498 = scmp.eq.s32.totalorder %s43, 1
      %p499 = por %p497, %p498
      %p500 = scmp.ne.s32.totalorder %s491, %s492
      %p501 = scmp.eq.s32.totalorder %s43, 0
      %p502 = por %p500, %p501
      %p503 = scmp.ne.s32.totalorder %s491, %s492
      %p504 = scmp.eq.s32.totalorder %s44, 1
      %p505 = por %p503, %p504
      %p507 = scmp.ne.s32.totalorder %s492, %s506
      %p508 = scmp.eq.s32.totalorder %s44, 0
      %p509 = por %p507, %p508
      %s511 = sadd.s32 %s510, 1
      %p514 = scmp.eq.s32.totalorder %s38, 1
      %p515 = scmp.ne.s32.totalorder %s510, %s512
      %p516 = scmp.eq.s32.totalorder %s38, 0
      %p517 = por %p515, %p516
      %p518 = scmp.ne.s32.totalorder %s510, %s512
      %p519 = scmp.eq.s32.totalorder %s43, 1
      %p520 = por %p518, %p519
      %p521 = scmp.ne.s32.totalorder %s512, %s513
      %p522 = scmp.eq.s32.totalorder %s43, 0
      %p523 = por %p521, %p522
      %p524 = scmp.ne.s32.totalorder %s512, %s513
      %p525 = scmp.eq.s32.totalorder %s44, 1
      %p526 = por %p524, %p525
      %p528 = scmp.ne.s32.totalorder %s513, %s527
      %p529 = scmp.eq.s32.totalorder %s44, 0
      %p530 = por %p528, %p529
      %s531 = ssub.s32 %s45, %s57
      %p532 = scmp.eq.s32.totalorder %s531, 0
      %s534 = sadd.s32 %s533, 1
      %s535 = scalar_select %p532, %s533, %s534
      %p538 = pneg %p532
      %p539 = scmp.eq.s32.totalorder %s38, 1
      %p540 = por %p538, %p539
      %p541 = scmp.ne.s32.totalorder %s533, %s536
      %p542 = scmp.eq.s32.totalorder %s38, 0
      %p543 = por %p541, %p542
      %p544 = scmp.ne.s32.totalorder %s533, %s536
      %p545 = scmp.eq.s32.totalorder %s43, 1
      %p546 = por %p544, %p545
      %p547 = scmp.ne.s32.totalorder %s536, %s537
      %p548 = scmp.eq.s32.totalorder %s43, 0
      %p549 = por %p547, %p548
      %p550 = scmp.ne.s32.totalorder %s536, %s537
      %p551 = scmp.eq.s32.totalorder %s44, 1
      %p552 = por %p550, %p551
      %p554 = scmp.ne.s32.totalorder %s537, %s553
      %p555 = scmp.eq.s32.totalorder %s44, 0
      %p556 = por %p554, %p555
      %s557 = ssub.s32 %s45, %s57
      %p558 = scmp.eq.s32.totalorder %s557, 0
      %s560 = sadd.s32 %s559, 1
      %s561 = scalar_select %p558, %s559, %s560
      %p564 = pneg %p558
      %p565 = scmp.eq.s32.totalorder %s38, 1
      %p566 = por %p564, %p565
      %p567 = scmp.ne.s32.totalorder %s559, %s562
      %p568 = scmp.eq.s32.totalorder %s38, 0
      %p569 = por %p567, %p568
      %p570 = scmp.ne.s32.totalorder %s559, %s562
      %p571 = scmp.eq.s32.totalorder %s43, 1
      %p572 = por %p570, %p571
      %p573 = scmp.ne.s32.totalorder %s562, %s563
      %p574 = scmp.eq.s32.totalorder %s43, 0
      %p575 = por %p573, %p574
      %p576 = scmp.ne.s32.totalorder %s562, %s563
      %p577 = scmp.eq.s32.totalorder %s44, 1
      %p578 = por %p576, %p577
      %p580 = scmp.ne.s32.totalorder %s563, %s579
      %p581 = scmp.eq.s32.totalorder %s44, 0
      %p582 = por %p580, %p581
      %s583 = ssub.s32 %s45, %s57
      %p584 = scmp.eq.s32.totalorder %s583, 0
      %s586 = sadd.s32 %s585, 1
      %s587 = scalar_select %p584, %s585, %s586
      %p590 = pneg %p584
      %p591 = scmp.eq.s32.totalorder %s38, 1
      %p592 = por %p590, %p591
      %p593 = scmp.ne.s32.totalorder %s585, %s588
      %p594 = scmp.eq.s32.totalorder %s38, 0
      %p595 = por %p593, %p594
      %p596 = scmp.ne.s32.totalorder %s585, %s588
      %p597 = scmp.eq.s32.totalorder %s43, 1
      %p598 = por %p596, %p597
      %p599 = scmp.ne.s32.totalorder %s588, %s589
      %p600 = scmp.eq.s32.totalorder %s43, 0
      %p601 = por %p599, %p600
      %p602 = scmp.ne.s32.totalorder %s588, %s589
      %p603 = scmp.eq.s32.totalorder %s44, 1
      %p604 = por %p602, %p603
      %p606 = scmp.ne.s32.totalorder %s589, %s605
      %p607 = scmp.eq.s32.totalorder %s44, 0
      %p608 = por %p606, %p607
      %p609 = scmp.le.s32.totalorder 1, %s38
      %p610 = scmp.lt.s32.totalorder %s38, 3
      %p611 = pnand %p609, %p610
      %p612 = pneg %p611
      // Predicated region
      $region9: #{tpu_custom_call.1} parent=5 // pred_check
        _
      $region10: #{tpu_custom_call.1} parent=5 // pred_check_branch
        %614 = sbr.rel (%p611) target = $region12
      $region11: #{tpu_custom_call.1} parent=5 // pred_region
        %s615 = ssub.s32 %s38, 1
        // Predicated region
        $region13: #{tpu_custom_call.1} parent=11 // pred_check
          %p616 = pneg %p76
        $region14: #{tpu_custom_call.1} parent=11 // pred_check_branch
          %618 = sbr.rel (%p616) target = $region16
        $region15: #{tpu_custom_call.1} parent=11 // pred_region
          %s620 = ssub.s32 32, 32
          %621 = vsyncadd [#allocation6], %s620
          %s622 = smul.addr %s47, 32
          %s623 = scalar_lea.hbm %s0, %s622
          %s625 = sshll.u32 [#allocation5], 4
          %s626 = int_to_ptr.vmem [resolvable:$true] %s625
          %628 = dma.hbm_to_vmem [thread:$0]  %s623, 32, %s626, [#allocation6]
        $region16: #{tpu_custom_call.1} parent=11 // pred_fallthru
          _
        // Predicated region
        $region17: #{tpu_custom_call.1} parent=11 // pred_check
          %p629 = pneg %p102
        $region18: #{tpu_custom_call.1} parent=11 // pred_check_branch
          %631 = sbr.rel (%p629) target = $region20
        $region19: #{tpu_custom_call.1} parent=11 // pred_region
          %s633 = ssub.s32 32, 32
          %634 = vsyncadd [#allocation9], %s633
          %s635 = smul.addr %s47, 32
          %s636 = scalar_lea.hbm %s1, %s635
          %s638 = sshll.u32 [#allocation8], 4
          %s639 = int_to_ptr.vmem [resolvable:$true] %s638
          %641 = dma.hbm_to_vmem [thread:$0]  %s636, 32, %s639, [#allocation9]
        $region20: #{tpu_custom_call.1} parent=11 // pred_fallthru
          _
        // Predicated region
        $region21: #{tpu_custom_call.1} parent=11 // pred_check
          %p642 = pneg %p128
        $region22: #{tpu_custom_call.1} parent=11 // pred_check_branch
          %644 = sbr.rel (%p642) target = $region24
        $region23: #{tpu_custom_call.1} parent=11 // pred_region
          %p645 = scmp.lt.s32.totalorder %s47, 0
          %s646 = scalar_select %p645, %s47, 0
          %s647 = smul.addr %s646, 2
          %s648 = scalar_lea.vmem %s2, %s647
        $region24: #{tpu_custom_call.1} parent=11 // pred_fallthru
          _
        // Predicated region
        $region25: #{tpu_custom_call.1} parent=11 // pred_check
          %p649 = pneg %p182
        $region26: #{tpu_custom_call.1} parent=11 // pred_check_branch
          %651 = sbr.rel (%p649) target = $region28
        $region27: #{tpu_custom_call.1} parent=11 // pred_region
          %p652 = scmp.lt.s32.totalorder %s47, 0
          %s653 = scalar_select %p652, %s47, 0
          %s654 = smul.addr %s653, 2
          %s655 = scalar_lea.vmem %s4, %s654
        $region28: #{tpu_custom_call.1} parent=11 // pred_fallthru
          _
        // Predicated region
        $region29: #{tpu_custom_call.1} parent=11 // pred_check
          %p656 = pneg %p208
        $region30: #{tpu_custom_call.1} parent=11 // pred_check_branch
          %658 = sbr.rel (%p656) target = $region32
        $region31: #{tpu_custom_call.1} parent=11 // pred_region
          %p659 = scmp.lt.s32.totalorder %s47, 0
          %s660 = scalar_select %p659, %s47, 0
          %s661 = smul.addr %s660, 2
          %s662 = scalar_lea.vmem %s5, %s661
        $region32: #{tpu_custom_call.1} parent=11 // pred_fallthru
          _
        // Predicated region
        $region33: #{tpu_custom_call.1} parent=11 // pred_check
          %p663 = pneg %p229
        $region34: #{tpu_custom_call.1} parent=11 // pred_check_branch
          %665 = sbr.rel (%p663) target = $region36
        $region35: #{tpu_custom_call.1} parent=11 // pred_region
          %s667 = ssub.s32 512, 512
          %668 = vsyncadd [#allocation9], %s667
          %s669 = sshll.u32 [#allocation11], 4
          %s670 = int_to_ptr.vmem [resolvable:$true] %s669
          %675 = dma.hbm_to_vmem [thread:$0]  %s6, 512, %s670, [#allocation9], 128, 128, 8
        $region36: #{tpu_custom_call.1} parent=11 // pred_fallthru
          _
        // Predicated region
        $region37: #{tpu_custom_call.1} parent=11 // pred_check
          %p676 = pneg %p250
        $region38: #{tpu_custom_call.1} parent=11 // pred_check_branch
          %678 = sbr.rel (%p676) target = $region40
        $region39: #{tpu_custom_call.1} parent=11 // pred_region
          %s680 = ssub.s32 512, 512
          %681 = vsyncadd [#allocation13], %s680
          %s682 = sshll.u32 [#allocation12], 4
          %s683 = int_to_ptr.vmem [resolvable:$true] %s682
          %688 = dma.hbm_to_vmem [thread:$0]  %s7, 512, %s683, [#allocation13], 128, 128, 8
        $region40: #{tpu_custom_call.1} parent=11 // pred_fallthru
          _
        // Predicated region
        $region41: #{tpu_custom_call.1} parent=11 // pred_check
          %p689 = pneg %p271
        $region42: #{tpu_custom_call.1} parent=11 // pred_check_branch
          %691 = sbr.rel (%p689) target = $region44
        $region43: #{tpu_custom_call.1} parent=11 // pred_region
          %s693 = ssub.s32 512, 512
          %694 = vsyncadd [#allocation13], %s693
          %s695 = sshll.u32 [#allocation14], 4
          %s696 = int_to_ptr.vmem [resolvable:$true] %s695
          %701 = dma.hbm_to_vmem [thread:$0]  %s8, 512, %s696, [#allocation13], 128, 128, 8
        $region44: #{tpu_custom_call.1} parent=11 // pred_fallthru
          _
        // Predicated region
        $region45: #{tpu_custom_call.1} parent=11 // pred_check
          %p702 = pneg %p292
        $region46: #{tpu_custom_call.1} parent=11 // pred_check_branch
          %704 = sbr.rel (%p702) target = $region48
        $region47: #{tpu_custom_call.1} parent=11 // pred_region
          _
        $region48: #{tpu_custom_call.1} parent=11 // pred_fallthru
          _
        // Predicated region
        $region49: #{tpu_custom_call.1} parent=11 // pred_check
          %p705 = pneg %p313
        $region50: #{tpu_custom_call.1} parent=11 // pred_check_branch
          %707 = sbr.rel (%p705) target = $region52
        $region51: #{tpu_custom_call.1} parent=11 // pred_region
          _
        $region52: #{tpu_custom_call.1} parent=11 // pred_fallthru
          _
        // Predicated region
        $region53: #{tpu_custom_call.1} parent=11 // pred_check
          %p708 = pneg %p334
        $region54: #{tpu_custom_call.1} parent=11 // pred_check_branch
          %710 = sbr.rel (%p708) target = $region56
        $region55: #{tpu_custom_call.1} parent=11 // pred_region
          %s712 = ssub.s32 512, 512
          %713 = vsyncadd [#allocation16], %s712
          %s714 = sshll.u32 [#allocation15], 4
          %s715 = int_to_ptr.vmem [resolvable:$true] %s714
          %720 = dma.hbm_to_vmem [thread:$0]  %s11, 512, %s715, [#allocation16], 128, 128, 8
        $region56: #{tpu_custom_call.1} parent=11 // pred_fallthru
          _
        // Predicated region
        $region57: #{tpu_custom_call.1} parent=11 // pred_check
          %p721 = pneg %p355
        $region58: #{tpu_custom_call.1} parent=11 // pred_check_branch
          %723 = sbr.rel (%p721) target = $region60
        $region59: #{tpu_custom_call.1} parent=11 // pred_region
          %s725 = ssub.s32 512, 512
          %726 = vsyncadd [#allocation16], %s725
          %s727 = sshll.u32 [#allocation17], 4
          %s728 = int_to_ptr.vmem [resolvable:$true] %s727
          %733 = dma.hbm_to_vmem [thread:$0]  %s12, 512, %s728, [#allocation16], 128, 128, 8
        $region60: #{tpu_custom_call.1} parent=11 // pred_fallthru
          _
        // Predicated region
        $region61: #{tpu_custom_call.1} parent=11 // pred_check
          %p734 = pneg %p376
        $region62: #{tpu_custom_call.1} parent=11 // pred_check_branch
          %736 = sbr.rel (%p734) target = $region64
        $region63: #{tpu_custom_call.1} parent=11 // pred_region
          %s738 = ssub.s32 512, 512
          %739 = vsyncadd [#allocation19], %s738
          %s740 = sshll.u32 [#allocation18], 4
          %s741 = int_to_ptr.vmem [resolvable:$true] %s740
          %746 = dma.hbm_to_vmem [thread:$0]  %s13, 512, %s741, [#allocation19], 128, 128, 8
        $region64: #{tpu_custom_call.1} parent=11 // pred_fallthru
          _
        // Predicated region
        $region65: #{tpu_custom_call.1} parent=11 // pred_check
          %p747 = pneg %p397
        $region66: #{tpu_custom_call.1} parent=11 // pred_check_branch
          %749 = sbr.rel (%p747) target = $region68
        $region67: #{tpu_custom_call.1} parent=11 // pred_region
          _
        $region68: #{tpu_custom_call.1} parent=11 // pred_fallthru
          _
        // Predicated region
        $region69: #{tpu_custom_call.1} parent=11 // pred_check
          %p750 = pneg %p418
        $region70: #{tpu_custom_call.1} parent=11 // pred_check_branch
          %752 = sbr.rel (%p750) target = $region72
        $region71: #{tpu_custom_call.1} parent=11 // pred_region
          _
        $region72: #{tpu_custom_call.1} parent=11 // pred_fallthru
          _
        // Predicated region
        $region73: #{tpu_custom_call.1} parent=11 // pred_check
          %p753 = pneg %p439
        $region74: #{tpu_custom_call.1} parent=11 // pred_check_branch
          %755 = sbr.rel (%p753) target = $region76
        $region75: #{tpu_custom_call.1} parent=11 // pred_region
          %s757 = ssub.s32 512, 512
          %758 = vsyncadd [#allocation19], %s757
          %s759 = sshll.u32 [#allocation20], 4
          %s760 = int_to_ptr.vmem [resolvable:$true] %s759
          %765 = dma.hbm_to_vmem [thread:$0]  %s16, 512, %s760, [#allocation19], 128, 128, 8
        $region76: #{tpu_custom_call.1} parent=11 // pred_fallthru
          _
        // Predicated region
        $region77: #{tpu_custom_call.1} parent=11 // pred_check
          %p766 = pneg %p460
        $region78: #{tpu_custom_call.1} parent=11 // pred_check_branch
          %768 = sbr.rel (%p766) target = $region80
        $region79: #{tpu_custom_call.1} parent=11 // pred_region
          %s770 = ssub.s32 512, 512
          %771 = vsyncadd [#allocation22], %s770
          %s772 = sshll.u32 [#allocation21], 4
          %s773 = int_to_ptr.vmem [resolvable:$true] %s772
          %778 = dma.hbm_to_vmem [thread:$0]  %s17, 512, %s773, [#allocation22], 128, 128, 8
        $region80: #{tpu_custom_call.1} parent=11 // pred_fallthru
          _
        // Predicated region
        $region81: #{tpu_custom_call.1} parent=11 // pred_check
          %p779 = pneg %p481
        $region82: #{tpu_custom_call.1} parent=11 // pred_check_branch
          %781 = sbr.rel (%p779) target = $region84
        $region83: #{tpu_custom_call.1} parent=11 // pred_region
          _
        $region84: #{tpu_custom_call.1} parent=11 // pred_fallthru
          _
        // Predicated region
        $region85: #{tpu_custom_call.1} parent=11 // pred_check
          %p782 = pneg %p502
        $region86: #{tpu_custom_call.1} parent=11 // pred_check_branch
          %784 = sbr.rel (%p782) target = $region88
        $region87: #{tpu_custom_call.1} parent=11 // pred_region
          _
        $region88: #{tpu_custom_call.1} parent=11 // pred_fallthru
          _
        // Predicated region
        $region89: #{tpu_custom_call.1} parent=11 // pred_check
          %p785 = pneg %p523
        $region90: #{tpu_custom_call.1} parent=11 // pred_check_branch
          %787 = sbr.rel (%p785) target = $region92
        $region91: #{tpu_custom_call.1} parent=11 // pred_region
          _
        $region92: #{tpu_custom_call.1} parent=11 // pred_fallthru
          _
      $region12: #{tpu_custom_call.1} parent=5 // pred_fallthru
        _
      %p788 = scmp.lt.s32.totalorder %s38, 2
      // Predicated region
      $region93: #{tpu_custom_call.1} parent=5 // pred_check
        %p789 = pneg %p788
      $region94: #{tpu_custom_call.1} parent=5 // pred_check_branch
        %791 = sbr.rel (%p789) target = $region96
      $region95: #{tpu_custom_call.1} parent=5 // pred_region
        // Predicated region
        $region97: #{tpu_custom_call.1} parent=95 // pred_check
          %p792 = pneg %p150
        $region98: #{tpu_custom_call.1} parent=95 // pred_check_branch
          %794 = sbr.rel (%p792) target = $region100
        $region99: #{tpu_custom_call.1} parent=95 // pred_region
          %s795 = sand.u32 %s38, 1
          %s796 = scalar_lea.sflag [#allocation6], %s795
          %s797 = sand.u32 %s140, 1
          %s798 = smul.addr %s797, 4
          %s799 = scalar_lea.vmem [#allocation10], %s798
          %s800 = smul.u32 2, %s46
          %s802 = ssub.s32 64, 64
          %803 = vsyncadd %s796, %s802
          %s804 = sadd.s32 %s45, %s800
          %s805 = smul.addr %s804, 32
          %s806 = scalar_lea.hbm %s3, %s805
          %s807 = sshll.u32 %s799, 4
          %s808 = int_to_ptr.vmem [resolvable:$true] %s807
          %813 = dma.hbm_to_vmem [thread:$0]  %s806, 64, %s808, %s796, 32, 32, 2
        $region100: #{tpu_custom_call.1} parent=95 // pred_fallthru
          _
      $region96: #{tpu_custom_call.1} parent=5 // pred_fallthru
        _
      %p814 = scmp.le.s32.totalorder 1, %s38
      %p815 = scmp.lt.s32.totalorder %s38, 3
      %p816 = pnand %p814, %p815
      %p817 = pneg %p816
      // Predicated region
      $region101: #{tpu_custom_call.1} parent=5 // pred_check
        _
      $region102: #{tpu_custom_call.1} parent=5 // pred_check_branch
        %819 = sbr.rel (%p816) target = $region104
      $region103: #{tpu_custom_call.1} parent=5 // pred_region
        %s820 = ssub.s32 %s38, 1
        // Predicated region
        $region105: #{tpu_custom_call.1} parent=103 // pred_check
          %p821 = pneg %p76
        $region106: #{tpu_custom_call.1} parent=103 // pred_check_branch
          %823 = sbr.rel (%p821) target = $region108
        $region107: #{tpu_custom_call.1} parent=103 // pred_region
          %824 = dma.done [#allocation6], 32
        $region108: #{tpu_custom_call.1} parent=103 // pred_fallthru
          _
        // Predicated region
        $region109: #{tpu_custom_call.1} parent=103 // pred_check
          %p825 = pneg %p102
        $region110: #{tpu_custom_call.1} parent=103 // pred_check_branch
          %827 = sbr.rel (%p825) target = $region112
        $region111: #{tpu_custom_call.1} parent=103 // pred_region
          %828 = dma.done [#allocation9], 32
        $region112: #{tpu_custom_call.1} parent=103 // pred_fallthru
          _
        %s829 = sand.u32 %s43, 1
        %s830 = scalar_lea.sflag [#allocation6], %s829
        %s831 = sand.u32 %s143, 1
        %s832 = smul.addr %s831, 4
        %s833 = scalar_lea.vmem [#allocation10], %s832
        // Predicated region
        $region113: #{tpu_custom_call.1} parent=103 // pred_check
          %p834 = pneg %p156
        $region114: #{tpu_custom_call.1} parent=103 // pred_check_branch
          %836 = sbr.rel (%p834) target = $region116
        $region115: #{tpu_custom_call.1} parent=103 // pred_region
          %837 = dma.done %s830, 64
        $region116: #{tpu_custom_call.1} parent=103 // pred_fallthru
          _
        // Predicated region
        $region117: #{tpu_custom_call.1} parent=103 // pred_check
          %p838 = pneg %p229
        $region118: #{tpu_custom_call.1} parent=103 // pred_check_branch
          %840 = sbr.rel (%p838) target = $region120
        $region119: #{tpu_custom_call.1} parent=103 // pred_region
          %841 = dma.done [#allocation9], 512
        $region120: #{tpu_custom_call.1} parent=103 // pred_fallthru
          _
        // Predicated region
        $region121: #{tpu_custom_call.1} parent=103 // pred_check
          %p842 = pneg %p250
        $region122: #{tpu_custom_call.1} parent=103 // pred_check_branch
          %844 = sbr.rel (%p842) target = $region124
        $region123: #{tpu_custom_call.1} parent=103 // pred_region
          %845 = dma.done [#allocation13], 512
        $region124: #{tpu_custom_call.1} parent=103 // pred_fallthru
          _
        // Predicated region
        $region125: #{tpu_custom_call.1} parent=103 // pred_check
          %p846 = pneg %p271
        $region126: #{tpu_custom_call.1} parent=103 // pred_check_branch
          %848 = sbr.rel (%p846) target = $region128
        $region127: #{tpu_custom_call.1} parent=103 // pred_region
          %849 = dma.done [#allocation13], 512
        $region128: #{tpu_custom_call.1} parent=103 // pred_fallthru
          _
        // Predicated region
        $region129: #{tpu_custom_call.1} parent=103 // pred_check
          %p850 = pneg %p334
        $region130: #{tpu_custom_call.1} parent=103 // pred_check_branch
          %852 = sbr.rel (%p850) target = $region132
        $region131: #{tpu_custom_call.1} parent=103 // pred_region
          %853 = dma.done [#allocation16], 512
        $region132: #{tpu_custom_call.1} parent=103 // pred_fallthru
          _
        // Predicated region
        $region133: #{tpu_custom_call.1} parent=103 // pred_check
          %p854 = pneg %p355
        $region134: #{tpu_custom_call.1} parent=103 // pred_check_branch
          %856 = sbr.rel (%p854) target = $region136
        $region135: #{tpu_custom_call.1} parent=103 // pred_region
          %857 = dma.done [#allocation16], 512
        $region136: #{tpu_custom_call.1} parent=103 // pred_fallthru
          _
        // Predicated region
        $region137: #{tpu_custom_call.1} parent=103 // pred_check
          %p858 = pneg %p376
        $region138: #{tpu_custom_call.1} parent=103 // pred_check_branch
          %860 = sbr.rel (%p858) target = $region140
        $region139: #{tpu_custom_call.1} parent=103 // pred_region
          %861 = dma.done [#allocation19], 512
        $region140: #{tpu_custom_call.1} parent=103 // pred_fallthru
          _
        // Predicated region
        $region141: #{tpu_custom_call.1} parent=103 // pred_check
          %p862 = pneg %p439
        $region142: #{tpu_custom_call.1} parent=103 // pred_check_branch
          %864 = sbr.rel (%p862) target = $region144
        $region143: #{tpu_custom_call.1} parent=103 // pred_region
          %865 = dma.done [#allocation19], 512
        $region144: #{tpu_custom_call.1} parent=103 // pred_fallthru
          _
        // Predicated region
        $region145: #{tpu_custom_call.1} parent=103 // pred_check
          %p866 = pneg %p460
        $region146: #{tpu_custom_call.1} parent=103 // pred_check_branch
          %868 = sbr.rel (%p866) target = $region148
        $region147: #{tpu_custom_call.1} parent=103 // pred_region
          %869 = dma.done [#allocation22], 512
        $region148: #{tpu_custom_call.1} parent=103 // pred_fallthru
          _
        %p870 = pneg %p76
        %p871 = pneg %p73
        %p872 = pneg %p102
        %p873 = pneg %p99
        %p874 = scmp.lt.s32.totalorder %s47, 0
        %s875 = scalar_select %p874, %s47, 0
        %s876 = smul.addr %s875, 2
        %s877 = scalar_lea.vmem %s2, %s876
        %p878 = pneg %p128
        %p879 = pneg %p125
        %s880 = sand.u32 %s43, 1
        %s881 = scalar_lea.sflag [#allocation6], %s880
        %s882 = sand.u32 %s143, 1
        %s883 = smul.addr %s882, 4
        %s884 = scalar_lea.vmem [#allocation10], %s883
        %p885 = pneg %p156
        %p886 = pneg %p153
        %p887 = scmp.lt.s32.totalorder %s47, 0
        %s888 = scalar_select %p887, %s47, 0
        %s889 = smul.addr %s888, 2
        %s890 = scalar_lea.vmem %s4, %s889
        %p891 = pneg %p182
        %p892 = pneg %p179
        %p893 = scmp.lt.s32.totalorder %s47, 0
        %s894 = scalar_select %p893, %s47, 0
        %s895 = smul.addr %s894, 2
        %s896 = scalar_lea.vmem %s5, %s895
        %p897 = pneg %p208
        %p898 = pneg %p205
        %p899 = pneg %p229
        %p900 = pneg %p226
        %p901 = pneg %p250
        %p902 = pneg %p247
        %p903 = pneg %p271
        %p904 = pneg %p268
        %p905 = pneg %p292
        %p906 = pneg %p289
        %p907 = pneg %p313
        %p908 = pneg %p310
        %p909 = pneg %p334
        %p910 = pneg %p331
        %p911 = pneg %p355
        %p912 = pneg %p352
        %p913 = pneg %p376
        %p914 = pneg %p373
        %p915 = pneg %p397
        %p916 = pneg %p394
        %p917 = pneg %p418
        %p918 = pneg %p415
        %p919 = pneg %p439
        %p920 = pneg %p436
        %p921 = pneg %p460
        %p922 = pneg %p457
        %p923 = pneg %p481
        %p924 = pneg %p478
        %p925 = pneg %p502
        %p926 = pneg %p499
        %p927 = pneg %p523
        %p928 = pneg %p520
        %p929 = pneg %p549
        %p930 = pneg %p546
        %p931 = pneg %p575
        %p932 = pneg %p572
        %p933 = pneg %p601
        %p934 = pneg %p598
        %p935 = scmp.lt.s32.totalorder %s47, 0
        %s936 = scalar_select %p935, %s47, 0
        %s937 = smul.addr %s936, 2
        %s938 = scalar_lea.vmem %s23, %s937
        %p939 = scmp.lt.s32.totalorder %s47, 0
        %s940 = scalar_select %p939, %s47, 0
        %s941 = smul.addr %s940, 2
        %s942 = scalar_lea.vmem %s2, %s941
        %s943 = smul.u32 2, %s48
        %p944 = scmp.lt.s32.totalorder %s47, 0
        %s945 = scalar_select %p944, %s47, 0
        %s946 = smul.addr %s945, 2
        %s947 = scalar_lea.vmem %s4, %s946
        %p948 = scmp.lt.s32.totalorder %s47, 0
        %s949 = scalar_select %p948, %s47, 0
        %s950 = smul.addr %s949, 2
        %s951 = scalar_lea.vmem %s5, %s950
        %p952 = scmp.lt.s32.totalorder %s47, 0
        %s953 = scalar_select %p952, %s47, 0
        %s954 = smul.addr %s953, 2
        %s955 = scalar_lea.vmem %s23, %s954
        %p956 = scmp.eq.s32.totalorder %s48, 0
        // Predicated region
        $region149: #{tpu_custom_call.1} parent=103 // pred_check
          %p957 = pneg %p956
        $region150: #{tpu_custom_call.1} parent=103 // pred_check_branch
          %959 = sbr.rel (%p957) target = $region152
        $region151: #{tpu_custom_call.1} parent=103 // pred_region
          %vm960 = vcmask 1024
          %961 = vst.msk [vmem:[#allocation2] sm:$0x3] %vm960, -inf
          %962 = vst.msk [vmem:[#allocation3] sm:$0x3] %vm960, 0.0
          %vm963 = vcmask 254976
          %964 = vst.msk [vmem:[#allocation4] sm:$0x3] %vm963, 0.0
        $region152: #{tpu_custom_call.1} parent=103 // pred_fallthru
          _
        %v965 = vld [vmem:[%s833] sm:$0x3]
        %v966 = vld [vmem:[%s833 + $0x2] sm:$0x3]
        %v967 = vld [vmem:[%s20] sm:$0x1]
        %v969 = vlaneseq
        %v970 = vshrl.u32 %v969, 7
        %v971 = vsub.s32 0, %v970
        %v972 = vrot.slane %v967, %v971
        %v974 = vmul.f32 %v965, %v972
        %v975 = vmul.f32 %v966, %v972
        %vm976 = vcmask 254976
        %v977 = vsel %vm976, %v974, 0.0
        %978 = vadd.xlane.f32.xlu0 %v977
        %v979 = vpop.xlane.xlu0 %978
        %v980 = vsel %vm976, %v975, 0.0
        %981 = vadd.xlane.f32.xlu0 %v980
        %v982 = vpop.xlane.xlu0 %981
        %s983 = smul.u32 %s48, 2
        %s984 = smul.u32 %s983, 2
        %s985 = scalar_lea.vmem %s955, %s984
        %vm986 = vcmask 1024
        %987 = vst.msk [vmem:[%s985] sm:$0x3] %vm986, %v979
        %988 = vst.msk [vmem:[%s985 + $0x2] sm:$0x3] %vm986, %v982
        %v989 = vld [vmem:[#allocation2] sm:$0x3]
        %vm990 = vcmask 1041408
        %v991 = vsel %vm990, %v979, -inf
        %v992 = vsel %vm990, %v982, -inf
        %v993 = vmax.f32 %v991, %v992
        %v994 = vmax.f32 %v989, %v993
        %v995 = vsub.f32 %v989, %v994
        %v996 = vmul.f32 %v995, 1.442695
        %v997 = vpow.pop %v996
        %v998 = vsub.f32 %v979, %v994
        %v999 = vsub.f32 %v982, %v994
        %v1000 = vmul.f32 %v998, 1.442695
        %v1001 = vpow.pop %v1000
        %v1002 = vmul.f32 %v999, 1.442695
        %v1003 = vpow.pop %v1002
        %v1004 = vld [vmem:[#allocation3] sm:$0x3]
        %v1005 = vmul.f32 %v1004, %v997
        %v1006 = vsel %vm986, %v1001, 0.0
        %v1007 = vsel %vm986, %v1003, 0.0
        %v1008 = vadd.f32 %v1006, %v1007
        %v1009 = vadd.f32 %v1005, %v1008
        %1010 = vst.msk [vmem:[#allocation3] sm:$0x3] %vm986, %v1009
        %v1011 = vld [vmem:[#allocation4] sm:$0x3]
        %1013 = vset.pattern.permute.xlu0 0
        %1014 = vperm.xlu0 %1013, %v997
        %v1015 = vpop.permute.xlu0 %1014
        %v1017 = vmul.f32 %v1011, %v1015
        %1019 = vset.pattern.permute.xlu0 0
        %1020 = vperm.xlu0 %1019, %v1001
        %v1021 = vpop.permute.xlu0 %1020
        %1024 = vset.pattern.permute.xlu0 0
        %1025 = vperm.xlu0 %1024, %v1003
        %v1026 = vpop.permute.xlu0 %1025
        %v1028 = vmul.f32 %v1021, %v965
        %v1029 = vmul.f32 %v1026, %v966
        %v1030 = vsel %vm976, %v1028, 0.0
        %v1031 = vsel %vm976, %v1029, 0.0
        %v1032 = vadd.f32 %v1030, %v1031
        %v1033 = vadd.f32 %v1017, %v1032
        %1034 = vst.msk [vmem:[#allocation4] sm:$0x3] %vm976, %v1033
        %1035 = vst.msk [vmem:[#allocation2] sm:$0x3] %vm986, %v994
        %p1036 = scmp.eq.s32.totalorder %s48, 1
        // Predicated region
        $region153: #{tpu_custom_call.1} parent=103 // pred_check
          %p1037 = pneg %p1036
        $region154: #{tpu_custom_call.1} parent=103 // pred_check_branch
          %1039 = sbr.rel (%p1037) target = $region156
        $region155: #{tpu_custom_call.1} parent=103 // pred_region
          %v1040 = vld [vmem:[#allocation3] sm:$0x3]
          %v1041 = vrcp.pop %v1040
          %v1042 = vld [vmem:[%s955] sm:$0x3]
          %v1043 = vld [vmem:[%s955 + $0x2] sm:$0x3]
          %v1044 = vld [vmem:[%s955 + $0x4] sm:$0x3]
          %v1045 = vld [vmem:[%s955 + $0x6] sm:$0x3]
          %v1046 = vld [vmem:[#allocation2] sm:$0x3]
          %v1047 = vsub.f32 %v1042, %v1046
          %v1048 = vsub.f32 %v1043, %v1046
          %v1049 = vsub.f32 %v1044, %v1046
          %v1050 = vsub.f32 %v1045, %v1046
          %v1051 = vmul.f32 %v1047, 1.442695
          %v1052 = vpow.pop %v1051
          %v1053 = vmul.f32 %v1048, 1.442695
          %v1054 = vpow.pop %v1053
          %v1055 = vmul.f32 %v1049, 1.442695
          %v1056 = vpow.pop %v1055
          %v1057 = vmul.f32 %v1050, 1.442695
          %v1058 = vpow.pop %v1057
          %v1059 = vmul.f32 %v1052, %v1041
          %v1060 = vmul.f32 %v1054, %v1041
          %v1061 = vmul.f32 %v1056, %v1041
          %v1062 = vmul.f32 %v1058, %v1041
          %1063 = vst.msk [vmem:[%s955] sm:$0x3] %vm986, %v1059
          %1064 = vst.msk [vmem:[%s955 + $0x2] sm:$0x3] %vm986, %v1060
          %1065 = vst.msk [vmem:[%s955 + $0x4] sm:$0x3] %vm986, %v1061
          %1066 = vst.msk [vmem:[%s955 + $0x6] sm:$0x3] %vm986, %v1062
          %v1067 = vld [vmem:[#allocation4] sm:$0x3]
          %1069 = vset.pattern.permute.xlu0 0
          %1070 = vperm.xlu0 %1069, %v1041
          %v1071 = vpop.permute.xlu0 %1070
          %v1073 = vmul.f32 %v1067, %v1071
          %v1074 = vld [vmem:[#allocation5] sm:$0x3]
          %v1075 = vld [vmem:[#allocation8] sm:$0x3]
          %v1076 = vld [vmem:[%s947] sm:$0x3]
          %1078 = vset.pattern.permute.xlu0 0
          %1079 = vperm.xlu0 %1078, %v1075
          %v1080 = vpop.permute.xlu0 %1079
          %v1082 = vmul.f32 %v1076, %v1080
          %1083 = vset.pattern.permute.xlu0 1
          %1084 = vperm.xlu0 %1083, %v1075
          %v1085 = vpop.permute.xlu0 %1084
          %v1087 = vmul.f32 %v1076, %v1085
          %1089 = vrot.lane.b32.xlu0 %v1087, 96
          %v1090 = vpop.permute.xlu0 %1089
          %v1092 = vadd.f32 %v1082, %v1090
          %v1093 = vld [vmem:[#allocation11] sm:$0xff]
          %v1094 = vld [vmem:[#allocation11 + $0x8] sm:$0xff]
          %v1095 = vld [vmem:[#allocation11 + $0x10] sm:$0xff]
          %v1096 = vld [vmem:[#allocation11 + $0x18] sm:$0xff]
          %v1097 = vld [vmem:[#allocation12] sm:$0xff]
          %v1098 = vld [vmem:[#allocation12 + $0x8] sm:$0xff]
          %v1099 = vld [vmem:[#allocation12 + $0x10] sm:$0xff]
          %v1100 = vld [vmem:[#allocation12 + $0x18] sm:$0xff]
          %vm1101 = vcmask 261120
          %v1103 = vsel %vm1101, %v1092, 0
          %1105 = vmatprep.subr.mxu0 0.0
          %1106 = vmatpush1.msra.mxu0 0.0
          %1107 = vmatprep.subr.mxu0 0.0
          %1108 = vmatpush1.msra.mxu0 0.0
          %1109 = vmatprep.subr.mxu0 0.0
          %1110 = vmatpush1.msra.mxu0 0.0
          %1111 = vmatprep.subr.mxu0 0.0
          %1112 = vmatpush1.msra.mxu0 0.0
          %1113 = vmatprep.subr.mxu0 0.0
          %1114 = vmatpush1.msra.mxu0 0.0
          %1115 = vmatprep.subr.mxu0 0.0
          %1116 = vmatpush1.msra.mxu0 0.0
          %1117 = vmatprep.subr.mxu0 0.0
          %1118 = vmatpush1.msra.mxu0 0.0
          %1119 = vmatprep.subr.mxu0 0.0
          %1120 = vmatpush1.msra.mxu0 0.0
          %1121 = vmatprep.subr.mxu0 0.0
          %1122 = vmatpush1.msra.mxu0 0.0
          %1123 = vmatprep.subr.mxu0 0.0
          %1124 = vmatpush1.msra.mxu0 0.0
          %1125 = vmatprep.subr.mxu0 0.0
          %1126 = vmatpush1.msra.mxu0 0.0
          %1127 = vmatprep.subr.mxu0 0.0
          %1128 = vmatpush1.msra.mxu0 0.0
          %1129 = vmatprep.subr.mxu0 0.0
          %1130 = vmatpush1.msra.mxu0 %v1100
          %1131 = vmatprep.subr.mxu0 0.0
          %1132 = vmatpush1.msra.mxu0 %v1099
          %1133 = vmatprep.subr.mxu0 0.0
          %1134 = vmatpush1.msra.mxu0 %v1098
          %1135 = vmatprep.subr.mxu0 0.0
          %1136 = vmatpush1.msra.mxu0 %v1097
          %1137 = vmatprep.subr.mxu0 0.0
          %1138 = vmatpush2.msra.mxu0 0.0
          %1139 = vmatprep.subr.mxu0 0.0
          %1140 = vmatpush2.msra.mxu0 0.0
          %1141 = vmatprep.subr.mxu0 0.0
          %1142 = vmatpush2.msra.mxu0 0.0
          %1143 = vmatprep.subr.mxu0 0.0
          %1144 = vmatpush2.msra.mxu0 0.0
          %1145 = vmatprep.subr.mxu0 0.0
          %1146 = vmatpush2.msra.mxu0 0.0
          %1147 = vmatprep.subr.mxu0 0.0
          %1148 = vmatpush2.msra.mxu0 0.0
          %1149 = vmatprep.subr.mxu0 0.0
          %1150 = vmatpush2.msra.mxu0 0.0
          %1151 = vmatprep.subr.mxu0 0.0
          %1152 = vmatpush2.msra.mxu0 0.0
          %1153 = vmatprep.subr.mxu0 0.0
          %1154 = vmatpush2.msra.mxu0 0.0
          %1155 = vmatprep.subr.mxu0 0.0
          %1156 = vmatpush2.msra.mxu0 0.0
          %1157 = vmatprep.subr.mxu0 0.0
          %1158 = vmatpush2.msra.mxu0 0.0
          %1159 = vmatprep.subr.mxu0 0.0
          %1160 = vmatpush2.msra.mxu0 0.0
          %1161 = vmatprep.subr.mxu0 0.0
          %1162 = vmatpush2.msra.mxu0 0.0
          %1163 = vmatprep.subr.mxu0 0.0
          %1164 = vmatpush2.msra.mxu0 0.0
          %1165 = vmatprep.subr.mxu0 0.0
          %1166 = vmatpush2.msra.mxu0 0.0
          %1167 = vmatprep.subr.mxu0 0.0
          %1168 = vmatpush2.msra.mxu0 0.0
          %1169 = vmatprep.mubr.f32.mxu0 0.0
          %1170 = vmatmul.mubr.f32.gmra.mxu0 %v1103
          %v1171 = vpop.f32.mrf.mxu0
          %v1172 = vadd.f32 0.0, %v1171
          %v1173 = vpop.f32.mrf.mxu0
          %1174 = vdwg.mxu0
          %v1176 = vsel %vm1101, %v1074, 0
          %1178 = vmatprep.subr.mxu0 0.0
          %1179 = vmatpush1.msra.mxu0 0.0
          %1180 = vmatprep.subr.mxu0 0.0
          %1181 = vmatpush1.msra.mxu0 0.0
          %1182 = vmatprep.subr.mxu0 0.0
          %1183 = vmatpush1.msra.mxu0 0.0
          %1184 = vmatprep.subr.mxu0 0.0
          %1185 = vmatpush1.msra.mxu0 0.0
          %1186 = vmatprep.subr.mxu0 0.0
          %1187 = vmatpush1.msra.mxu0 0.0
          %1188 = vmatprep.subr.mxu0 0.0
          %1189 = vmatpush1.msra.mxu0 0.0
          %1190 = vmatprep.subr.mxu0 0.0
          %1191 = vmatpush1.msra.mxu0 0.0
          %1192 = vmatprep.subr.mxu0 0.0
          %1193 = vmatpush1.msra.mxu0 0.0
          %1194 = vmatprep.subr.mxu0 0.0
          %1195 = vmatpush1.msra.mxu0 0.0
          %1196 = vmatprep.subr.mxu0 0.0
          %1197 = vmatpush1.msra.mxu0 0.0
          %1198 = vmatprep.subr.mxu0 0.0
          %1199 = vmatpush1.msra.mxu0 0.0
          %1200 = vmatprep.subr.mxu0 0.0
          %1201 = vmatpush1.msra.mxu0 0.0
          %1202 = vmatprep.subr.mxu0 0.0
          %1203 = vmatpush1.msra.mxu0 %v1096
          %1204 = vmatprep.subr.mxu0 0.0
          %1205 = vmatpush1.msra.mxu0 %v1095
          %1206 = vmatprep.subr.mxu0 0.0
          %1207 = vmatpush1.msra.mxu0 %v1094
          %1208 = vmatprep.subr.mxu0 0.0
          %1209 = vmatpush1.msra.mxu0 %v1093
          %1210 = vmatprep.subr.mxu0 0.0
          %1211 = vmatpush2.msra.mxu0 0.0
          %1212 = vmatprep.subr.mxu0 0.0
          %1213 = vmatpush2.msra.mxu0 0.0
          %1214 = vmatprep.subr.mxu0 0.0
          %1215 = vmatpush2.msra.mxu0 0.0
          %1216 = vmatprep.subr.mxu0 0.0
          %1217 = vmatpush2.msra.mxu0 0.0
          %1218 = vmatprep.subr.mxu0 0.0
          %1219 = vmatpush2.msra.mxu0 0.0
          %1220 = vmatprep.subr.mxu0 0.0
          %1221 = vmatpush2.msra.mxu0 0.0
          %1222 = vmatprep.subr.mxu0 0.0
          %1223 = vmatpush2.msra.mxu0 0.0
          %1224 = vmatprep.subr.mxu0 0.0
          %1225 = vmatpush2.msra.mxu0 0.0
          %1226 = vmatprep.subr.mxu0 0.0
          %1227 = vmatpush2.msra.mxu0 0.0
          %1228 = vmatprep.subr.mxu0 0.0
          %1229 = vmatpush2.msra.mxu0 0.0
          %1230 = vmatprep.subr.mxu0 0.0
          %1231 = vmatpush2.msra.mxu0 0.0
          %1232 = vmatprep.subr.mxu0 0.0
          %1233 = vmatpush2.msra.mxu0 0.0
          %1234 = vmatprep.subr.mxu0 0.0
          %1235 = vmatpush2.msra.mxu0 0.0
          %1236 = vmatprep.subr.mxu0 0.0
          %1237 = vmatpush2.msra.mxu0 0.0
          %1238 = vmatprep.subr.mxu0 0.0
          %1239 = vmatpush2.msra.mxu0 0.0
          %1240 = vmatprep.subr.mxu0 0.0
          %1241 = vmatpush2.msra.mxu0 0.0
          %1242 = vmatprep.mubr.f32.mxu0 0.0
          %1243 = vmatmul.mubr.f32.gmra.mxu0 %v1176
          %v1244 = vpop.f32.mrf.mxu0
          %v1245 = vadd.f32 %v1172, %v1244
          %v1246 = vpop.f32.mrf.mxu0
          %1247 = vdwg.mxu0
          %v1248 = vld [vmem:[%s9] sm:$0x1]
          %v1250 = vlaneseq
          %v1251 = vshrl.u32 %v1250, 7
          %v1252 = vsub.s32 0, %v1251
          %v1253 = vrot.slane %v1248, %v1252
          %v1255 = vadd.f32 %v1245, %v1253
          %s1256 = scalar_lea.vmem %s833, 2 [#allocation10]
          %v1257 = vld [vmem:[%s1256] sm:$0x3]
          %v1258 = vld [vmem:[#allocation14] sm:$0xff]
          %v1259 = vld [vmem:[#allocation14 + $0x8] sm:$0xff]
          %v1260 = vld [vmem:[#allocation14 + $0x10] sm:$0xff]
          %v1261 = vld [vmem:[#allocation14 + $0x18] sm:$0xff]
          %v1262 = vld [vmem:[%s10] sm:$0x1]
          %v1264 = vlaneseq
          %v1265 = vshrl.u32 %v1264, 7
          %v1266 = vsub.s32 0, %v1265
          %v1267 = vrot.slane %v1262, %v1266
          %v1270 = vsel %vm1101, %v1257, 0
          %1272 = vmatprep.subr.mxu0 0.0
          %1273 = vmatpush1.msra.mxu0 0.0
          %1274 = vmatprep.subr.mxu0 0.0
          %1275 = vmatpush1.msra.mxu0 0.0
          %1276 = vmatprep.subr.mxu0 0.0
          %1277 = vmatpush1.msra.mxu0 0.0
          %1278 = vmatprep.subr.mxu0 0.0
          %1279 = vmatpush1.msra.mxu0 0.0
          %1280 = vmatprep.subr.mxu0 0.0
          %1281 = vmatpush1.msra.mxu0 0.0
          %1282 = vmatprep.subr.mxu0 0.0
          %1283 = vmatpush1.msra.mxu0 0.0
          %1284 = vmatprep.subr.mxu0 0.0
          %1285 = vmatpush1.msra.mxu0 0.0
          %1286 = vmatprep.subr.mxu0 0.0
          %1287 = vmatpush1.msra.mxu0 0.0
          %1288 = vmatprep.subr.mxu0 0.0
          %1289 = vmatpush1.msra.mxu0 0.0
          %1290 = vmatprep.subr.mxu0 0.0
          %1291 = vmatpush1.msra.mxu0 0.0
          %1292 = vmatprep.subr.mxu0 0.0
          %1293 = vmatpush1.msra.mxu0 0.0
          %1294 = vmatprep.subr.mxu0 0.0
          %1295 = vmatpush1.msra.mxu0 0.0
          %1296 = vmatprep.subr.mxu0 0.0
          %1297 = vmatpush1.msra.mxu0 %v1261
          %1298 = vmatprep.subr.mxu0 0.0
          %1299 = vmatpush1.msra.mxu0 %v1260
          %1300 = vmatprep.subr.mxu0 0.0
          %1301 = vmatpush1.msra.mxu0 %v1259
          %1302 = vmatprep.subr.mxu0 0.0
          %1303 = vmatpush1.msra.mxu0 %v1258
          %1304 = vmatprep.subr.mxu0 0.0
          %1305 = vmatpush2.msra.mxu0 0.0
          %1306 = vmatprep.subr.mxu0 0.0
          %1307 = vmatpush2.msra.mxu0 0.0
          %1308 = vmatprep.subr.mxu0 0.0
          %1309 = vmatpush2.msra.mxu0 0.0
          %1310 = vmatprep.subr.mxu0 0.0
          %1311 = vmatpush2.msra.mxu0 0.0
          %1312 = vmatprep.subr.mxu0 0.0
          %1313 = vmatpush2.msra.mxu0 0.0
          %1314 = vmatprep.subr.mxu0 0.0
          %1315 = vmatpush2.msra.mxu0 0.0
          %1316 = vmatprep.subr.mxu0 0.0
          %1317 = vmatpush2.msra.mxu0 0.0
          %1318 = vmatprep.subr.mxu0 0.0
          %1319 = vmatpush2.msra.mxu0 0.0
          %1320 = vmatprep.subr.mxu0 0.0
          %1321 = vmatpush2.msra.mxu0 0.0
          %1322 = vmatprep.subr.mxu0 0.0
          %1323 = vmatpush2.msra.mxu0 0.0
          %1324 = vmatprep.subr.mxu0 0.0
          %1325 = vmatpush2.msra.mxu0 0.0
          %1326 = vmatprep.subr.mxu0 0.0
          %1327 = vmatpush2.msra.mxu0 0.0
          %1328 = vmatprep.subr.mxu0 0.0
          %1329 = vmatpush2.msra.mxu0 0.0
          %1330 = vmatprep.subr.mxu0 0.0
          %1331 = vmatpush2.msra.mxu0 0.0
          %1332 = vmatprep.subr.mxu0 0.0
          %1333 = vmatpush2.msra.mxu0 0.0
          %1334 = vmatprep.subr.mxu0 0.0
          %1335 = vmatpush2.msra.mxu0 0.0
          %1336 = vmatprep.mubr.f32.mxu0 0.0
          %1337 = vmatmul.mubr.f32.gmra.mxu0 %v1270
          %v1338 = vpop.f32.mrf.mxu0
          %v1339 = vadd.f32 %v1267, %v1338
          %v1340 = vpop.f32.mrf.mxu0
          %1341 = vdwg.mxu0
          %v1342 = vadd.f32 %v1255, %v1339
          %v1343 = vxor.u32 %v1342, 2147483648
          %v1344 = vmul.f32 %v1343, 1.442695
          %v1345 = vpow.pop %v1344
          %v1346 = vadd.f32 %v1345, 1.0
          %v1347 = vrcp.pop %v1346
          %v1348 = vmul.f32 1.0, %v1347
          %1350 = vrot.lane.b32.xlu0 %v1339, 64
          %v1351 = vpop.permute.xlu0 %1350
          %v1353 = vmul.f32 %v1348, %v1351
          %1355 = vrot.lane.b32.xlu0 %v1353, 64
          %v1356 = vpop.permute.xlu0 %1355
          %v1358 = vadd.f32 %v1255, %v1356
          %v1359 = vtanh.pop %v1358
          %v1360 = vsub.f32 1.0, %v1348
          %1362 = vrot.lane.b32.xlu0 %v1359, 96
          %v1363 = vpop.permute.xlu0 %1362
          %v1365 = vmul.f32 %v1360, %v1363
          %1366 = vrot.lane.b32.xlu0 %v1257, 32
          %v1367 = vpop.permute.xlu0 %1366
          %v1369 = vmul.f32 %v1348, %v1367
          %v1370 = vadd.f32 %v1365, %v1369
          %v1371 = vld [vmem:[#allocation15] sm:$0xff]
          %v1372 = vld [vmem:[#allocation15 + $0x8] sm:$0xff]
          %v1373 = vld [vmem:[#allocation15 + $0x10] sm:$0xff]
          %v1374 = vld [vmem:[#allocation15 + $0x18] sm:$0xff]
          %v1375 = vld [vmem:[#allocation17] sm:$0xff]
          %v1376 = vld [vmem:[#allocation17 + $0x8] sm:$0xff]
          %v1377 = vld [vmem:[#allocation17 + $0x10] sm:$0xff]
          %v1378 = vld [vmem:[#allocation17 + $0x18] sm:$0xff]
          %v1380 = vsel %vm1101, %v1073, 0
          %1382 = vmatprep.subr.mxu0 0.0
          %1383 = vmatpush1.msra.mxu0 0.0
          %1384 = vmatprep.subr.mxu0 0.0
          %1385 = vmatpush1.msra.mxu0 0.0
          %1386 = vmatprep.subr.mxu0 0.0
          %1387 = vmatpush1.msra.mxu0 0.0
          %1388 = vmatprep.subr.mxu0 0.0
          %1389 = vmatpush1.msra.mxu0 0.0
          %1390 = vmatprep.subr.mxu0 0.0
          %1391 = vmatpush1.msra.mxu0 0.0
          %1392 = vmatprep.subr.mxu0 0.0
          %1393 = vmatpush1.msra.mxu0 0.0
          %1394 = vmatprep.subr.mxu0 0.0
          %1395 = vmatpush1.msra.mxu0 0.0
          %1396 = vmatprep.subr.mxu0 0.0
          %1397 = vmatpush1.msra.mxu0 0.0
          %1398 = vmatprep.subr.mxu0 0.0
          %1399 = vmatpush1.msra.mxu0 0.0
          %1400 = vmatprep.subr.mxu0 0.0
          %1401 = vmatpush1.msra.mxu0 0.0
          %1402 = vmatprep.subr.mxu0 0.0
          %1403 = vmatpush1.msra.mxu0 0.0
          %1404 = vmatprep.subr.mxu0 0.0
          %1405 = vmatpush1.msra.mxu0 0.0
          %1406 = vmatprep.subr.mxu0 0.0
          %1407 = vmatpush1.msra.mxu0 %v1378
          %1408 = vmatprep.subr.mxu0 0.0
          %1409 = vmatpush1.msra.mxu0 %v1377
          %1410 = vmatprep.subr.mxu0 0.0
          %1411 = vmatpush1.msra.mxu0 %v1376
          %1412 = vmatprep.subr.mxu0 0.0
          %1413 = vmatpush1.msra.mxu0 %v1375
          %1414 = vmatprep.subr.mxu0 0.0
          %1415 = vmatpush2.msra.mxu0 0.0
          %1416 = vmatprep.subr.mxu0 0.0
          %1417 = vmatpush2.msra.mxu0 0.0
          %1418 = vmatprep.subr.mxu0 0.0
          %1419 = vmatpush2.msra.mxu0 0.0
          %1420 = vmatprep.subr.mxu0 0.0
          %1421 = vmatpush2.msra.mxu0 0.0
          %1422 = vmatprep.subr.mxu0 0.0
          %1423 = vmatpush2.msra.mxu0 0.0
          %1424 = vmatprep.subr.mxu0 0.0
          %1425 = vmatpush2.msra.mxu0 0.0
          %1426 = vmatprep.subr.mxu0 0.0
          %1427 = vmatpush2.msra.mxu0 0.0
          %1428 = vmatprep.subr.mxu0 0.0
          %1429 = vmatpush2.msra.mxu0 0.0
          %1430 = vmatprep.subr.mxu0 0.0
          %1431 = vmatpush2.msra.mxu0 0.0
          %1432 = vmatprep.subr.mxu0 0.0
          %1433 = vmatpush2.msra.mxu0 0.0
          %1434 = vmatprep.subr.mxu0 0.0
          %1435 = vmatpush2.msra.mxu0 0.0
          %1436 = vmatprep.subr.mxu0 0.0
          %1437 = vmatpush2.msra.mxu0 0.0
          %1438 = vmatprep.subr.mxu0 0.0
          %1439 = vmatpush2.msra.mxu0 0.0
          %1440 = vmatprep.subr.mxu0 0.0
          %1441 = vmatpush2.msra.mxu0 0.0
          %1442 = vmatprep.subr.mxu0 0.0
          %1443 = vmatpush2.msra.mxu0 0.0
          %1444 = vmatprep.subr.mxu0 0.0
          %1445 = vmatpush2.msra.mxu0 0.0
          %1446 = vmatprep.mubr.f32.mxu0 0.0
          %1447 = vmatmul.mubr.f32.gmra.mxu0 %v1380
          %v1448 = vpop.f32.mrf.mxu0
          %v1449 = vadd.f32 0.0, %v1448
          %v1450 = vpop.f32.mrf.mxu0
          %1451 = vdwg.mxu0
          %1452 = vmatprep.subr.mxu0 0.0
          %1453 = vmatpush1.msra.mxu0 0.0
          %1454 = vmatprep.subr.mxu0 0.0
          %1455 = vmatpush1.msra.mxu0 0.0
          %1456 = vmatprep.subr.mxu0 0.0
          %1457 = vmatpush1.msra.mxu0 0.0
          %1458 = vmatprep.subr.mxu0 0.0
          %1459 = vmatpush1.msra.mxu0 0.0
          %1460 = vmatprep.subr.mxu0 0.0
          %1461 = vmatpush1.msra.mxu0 0.0
          %1462 = vmatprep.subr.mxu0 0.0
          %1463 = vmatpush1.msra.mxu0 0.0
          %1464 = vmatprep.subr.mxu0 0.0
          %1465 = vmatpush1.msra.mxu0 0.0
          %1466 = vmatprep.subr.mxu0 0.0
          %1467 = vmatpush1.msra.mxu0 0.0
          %1468 = vmatprep.subr.mxu0 0.0
          %1469 = vmatpush1.msra.mxu0 0.0
          %1470 = vmatprep.subr.mxu0 0.0
          %1471 = vmatpush1.msra.mxu0 0.0
          %1472 = vmatprep.subr.mxu0 0.0
          %1473 = vmatpush1.msra.mxu0 0.0
          %1474 = vmatprep.subr.mxu0 0.0
          %1475 = vmatpush1.msra.mxu0 0.0
          %1476 = vmatprep.subr.mxu0 0.0
          %1477 = vmatpush1.msra.mxu0 %v1374
          %1478 = vmatprep.subr.mxu0 0.0
          %1479 = vmatpush1.msra.mxu0 %v1373
          %1480 = vmatprep.subr.mxu0 0.0
          %1481 = vmatpush1.msra.mxu0 %v1372
          %1482 = vmatprep.subr.mxu0 0.0
          %1483 = vmatpush1.msra.mxu0 %v1371
          %1484 = vmatprep.subr.mxu0 0.0
          %1485 = vmatpush2.msra.mxu0 0.0
          %1486 = vmatprep.subr.mxu0 0.0
          %1487 = vmatpush2.msra.mxu0 0.0
          %1488 = vmatprep.subr.mxu0 0.0
          %1489 = vmatpush2.msra.mxu0 0.0
          %1490 = vmatprep.subr.mxu0 0.0
          %1491 = vmatpush2.msra.mxu0 0.0
          %1492 = vmatprep.subr.mxu0 0.0
          %1493 = vmatpush2.msra.mxu0 0.0
          %1494 = vmatprep.subr.mxu0 0.0
          %1495 = vmatpush2.msra.mxu0 0.0
          %1496 = vmatprep.subr.mxu0 0.0
          %1497 = vmatpush2.msra.mxu0 0.0
          %1498 = vmatprep.subr.mxu0 0.0
          %1499 = vmatpush2.msra.mxu0 0.0
          %1500 = vmatprep.subr.mxu0 0.0
          %1501 = vmatpush2.msra.mxu0 0.0
          %1502 = vmatprep.subr.mxu0 0.0
          %1503 = vmatpush2.msra.mxu0 0.0
          %1504 = vmatprep.subr.mxu0 0.0
          %1505 = vmatpush2.msra.mxu0 0.0
          %1506 = vmatprep.subr.mxu0 0.0
          %1507 = vmatpush2.msra.mxu0 0.0
          %1508 = vmatprep.subr.mxu0 0.0
          %1509 = vmatpush2.msra.mxu0 0.0
          %1510 = vmatprep.subr.mxu0 0.0
          %1511 = vmatpush2.msra.mxu0 0.0
          %1512 = vmatprep.subr.mxu0 0.0
          %1513 = vmatpush2.msra.mxu0 0.0
          %1514 = vmatprep.subr.mxu0 0.0
          %1515 = vmatpush2.msra.mxu0 0.0
          %1516 = vmatprep.mubr.f32.mxu0 0.0
          %1517 = vmatmul.mubr.f32.gmra.mxu0 %v1176
          %v1518 = vpop.f32.mrf.mxu0
          %v1519 = vadd.f32 %v1449, %v1518
          %v1520 = vpop.f32.mrf.mxu0
          %1521 = vdwg.mxu0
          %v1522 = vld [vmem:[%s14] sm:$0x1]
          %v1524 = vlaneseq
          %v1525 = vshrl.u32 %v1524, 7
          %v1526 = vsub.s32 0, %v1525
          %v1527 = vrot.slane %v1522, %v1526
          %v1529 = vadd.f32 %v1519, %v1527
          %v1530 = vld [vmem:[#allocation18] sm:$0xff]
          %v1531 = vld [vmem:[#allocation18 + $0x8] sm:$0xff]
          %v1532 = vld [vmem:[#allocation18 + $0x10] sm:$0xff]
          %v1533 = vld [vmem:[#allocation18 + $0x18] sm:$0xff]
          %v1534 = vld [vmem:[%s15] sm:$0x1]
          %v1536 = vlaneseq
          %v1537 = vshrl.u32 %v1536, 7
          %v1538 = vsub.s32 0, %v1537
          %v1539 = vrot.slane %v1534, %v1538
          %1541 = vmatprep.subr.mxu0 0.0
          %1542 = vmatpush1.msra.mxu0 0.0
          %1543 = vmatprep.subr.mxu0 0.0
          %1544 = vmatpush1.msra.mxu0 0.0
          %1545 = vmatprep.subr.mxu0 0.0
          %1546 = vmatpush1.msra.mxu0 0.0
          %1547 = vmatprep.subr.mxu0 0.0
          %1548 = vmatpush1.msra.mxu0 0.0
          %1549 = vmatprep.subr.mxu0 0.0
          %1550 = vmatpush1.msra.mxu0 0.0
          %1551 = vmatprep.subr.mxu0 0.0
          %1552 = vmatpush1.msra.mxu0 0.0
          %1553 = vmatprep.subr.mxu0 0.0
          %1554 = vmatpush1.msra.mxu0 0.0
          %1555 = vmatprep.subr.mxu0 0.0
          %1556 = vmatpush1.msra.mxu0 0.0
          %1557 = vmatprep.subr.mxu0 0.0
          %1558 = vmatpush1.msra.mxu0 0.0
          %1559 = vmatprep.subr.mxu0 0.0
          %1560 = vmatpush1.msra.mxu0 0.0
          %1561 = vmatprep.subr.mxu0 0.0
          %1562 = vmatpush1.msra.mxu0 0.0
          %1563 = vmatprep.subr.mxu0 0.0
          %1564 = vmatpush1.msra.mxu0 0.0
          %1565 = vmatprep.subr.mxu0 0.0
          %1566 = vmatpush1.msra.mxu0 %v1533
          %1567 = vmatprep.subr.mxu0 0.0
          %1568 = vmatpush1.msra.mxu0 %v1532
          %1569 = vmatprep.subr.mxu0 0.0
          %1570 = vmatpush1.msra.mxu0 %v1531
          %1571 = vmatprep.subr.mxu0 0.0
          %1572 = vmatpush1.msra.mxu0 %v1530
          %1573 = vmatprep.subr.mxu0 0.0
          %1574 = vmatpush2.msra.mxu0 0.0
          %1575 = vmatprep.subr.mxu0 0.0
          %1576 = vmatpush2.msra.mxu0 0.0
          %1577 = vmatprep.subr.mxu0 0.0
          %1578 = vmatpush2.msra.mxu0 0.0
          %1579 = vmatprep.subr.mxu0 0.0
          %1580 = vmatpush2.msra.mxu0 0.0
          %1581 = vmatprep.subr.mxu0 0.0
          %1582 = vmatpush2.msra.mxu0 0.0
          %1583 = vmatprep.subr.mxu0 0.0
          %1584 = vmatpush2.msra.mxu0 0.0
          %1585 = vmatprep.subr.mxu0 0.0
          %1586 = vmatpush2.msra.mxu0 0.0
          %1587 = vmatprep.subr.mxu0 0.0
          %1588 = vmatpush2.msra.mxu0 0.0
          %1589 = vmatprep.subr.mxu0 0.0
          %1590 = vmatpush2.msra.mxu0 0.0
          %1591 = vmatprep.subr.mxu0 0.0
          %1592 = vmatpush2.msra.mxu0 0.0
          %1593 = vmatprep.subr.mxu0 0.0
          %1594 = vmatpush2.msra.mxu0 0.0
          %1595 = vmatprep.subr.mxu0 0.0
          %1596 = vmatpush2.msra.mxu0 0.0
          %1597 = vmatprep.subr.mxu0 0.0
          %1598 = vmatpush2.msra.mxu0 0.0
          %1599 = vmatprep.subr.mxu0 0.0
          %1600 = vmatpush2.msra.mxu0 0.0
          %1601 = vmatprep.subr.mxu0 0.0
          %1602 = vmatpush2.msra.mxu0 0.0
          %1603 = vmatprep.subr.mxu0 0.0
          %1604 = vmatpush2.msra.mxu0 0.0
          %1605 = vmatprep.mubr.f32.mxu0 0.0
          %1606 = vmatmul.mubr.f32.gmra.mxu0 %v1103
          %v1607 = vpop.f32.mrf.mxu0
          %v1608 = vadd.f32 %v1539, %v1607
          %v1609 = vpop.f32.mrf.mxu0
          %1610 = vdwg.mxu0
          %v1611 = vadd.f32 %v1529, %v1608
          %v1612 = vxor.u32 %v1611, 2147483648
          %v1613 = vmul.f32 %v1612, 1.442695
          %v1614 = vpow.pop %v1613
          %v1615 = vadd.f32 %v1614, 1.0
          %v1616 = vrcp.pop %v1615
          %v1617 = vmul.f32 1.0, %v1616
          %1619 = vrot.lane.b32.xlu0 %v1608, 64
          %v1620 = vpop.permute.xlu0 %1619
          %v1622 = vmul.f32 %v1617, %v1620
          %1624 = vrot.lane.b32.xlu0 %v1622, 64
          %v1625 = vpop.permute.xlu0 %1624
          %v1627 = vadd.f32 %v1529, %v1625
          %v1628 = vtanh.pop %v1627
          %v1629 = vsub.f32 1.0, %v1617
          %1631 = vrot.lane.b32.xlu0 %v1628, 96
          %v1632 = vpop.permute.xlu0 %1631
          %v1634 = vmul.f32 %v1629, %v1632
          %1635 = vrot.lane.b32.xlu0 %v1092, 32
          %v1636 = vpop.permute.xlu0 %1635
          %v1638 = vmul.f32 %v1617, %v1636
          %v1639 = vadd.f32 %v1634, %v1638
          %v1640 = vld [vmem:[%s942] sm:$0x3]
          %1642 = vrot.lane.b32.xlu0 %v1639, 96
          %v1643 = vpop.permute.xlu0 %1642
          %v1645 = vsel %vm1101, %v1643, %v1639
          %v1646 = vsub.f32 1.0, %v1640
          %v1647 = vmul.f32 %v1076, %v1646
          %v1648 = vmul.f32 %v1645, %v1640
          %v1649 = vadd.f32 %v1647, %v1648
          %vm1650 = vcmask 517120
          %1651 = vst.msk [vmem:[#allocation24] sm:$0x3] %vm1650, %v1649
          %v1652 = vld [vmem:[#allocation20] sm:$0xff]
          %v1653 = vld [vmem:[#allocation20 + $0x8] sm:$0xff]
          %v1654 = vld [vmem:[#allocation20 + $0x10] sm:$0xff]
          %v1655 = vld [vmem:[#allocation20 + $0x18] sm:$0xff]
          %v1656 = vld [vmem:[%s18] sm:$0x1]
          %v1658 = vlaneseq
          %v1659 = vshrl.u32 %v1658, 7
          %v1660 = vsub.s32 0, %v1659
          %v1661 = vrot.slane %v1656, %v1660
          %v1663 = vsel %vm1101, %v1643, 0
          %1665 = vmatprep.subr.mxu0 0.0
          %1666 = vmatpush1.msra.mxu0 0.0
          %1667 = vmatprep.subr.mxu0 0.0
          %1668 = vmatpush1.msra.mxu0 0.0
          %1669 = vmatprep.subr.mxu0 0.0
          %1670 = vmatpush1.msra.mxu0 0.0
          %1671 = vmatprep.subr.mxu0 0.0
          %1672 = vmatpush1.msra.mxu0 0.0
          %1673 = vmatprep.subr.mxu0 0.0
          %1674 = vmatpush1.msra.mxu0 0.0
          %1675 = vmatprep.subr.mxu0 0.0
          %1676 = vmatpush1.msra.mxu0 0.0
          %1677 = vmatprep.subr.mxu0 0.0
          %1678 = vmatpush1.msra.mxu0 0.0
          %1679 = vmatprep.subr.mxu0 0.0
          %1680 = vmatpush1.msra.mxu0 0.0
          %1681 = vmatprep.subr.mxu0 0.0
          %1682 = vmatpush1.msra.mxu0 0.0
          %1683 = vmatprep.subr.mxu0 0.0
          %1684 = vmatpush1.msra.mxu0 0.0
          %1685 = vmatprep.subr.mxu0 0.0
          %1686 = vmatpush1.msra.mxu0 0.0
          %1687 = vmatprep.subr.mxu0 0.0
          %1688 = vmatpush1.msra.mxu0 0.0
          %1689 = vmatprep.subr.mxu0 0.0
          %1690 = vmatpush1.msra.mxu0 %v1655
          %1691 = vmatprep.subr.mxu0 0.0
          %1692 = vmatpush1.msra.mxu0 %v1654
          %1693 = vmatprep.subr.mxu0 0.0
          %1694 = vmatpush1.msra.mxu0 %v1653
          %1695 = vmatprep.subr.mxu0 0.0
          %1696 = vmatpush1.msra.mxu0 %v1652
          %1697 = vmatprep.subr.mxu0 0.0
          %1698 = vmatpush2.msra.mxu0 0.0
          %1699 = vmatprep.subr.mxu0 0.0
          %1700 = vmatpush2.msra.mxu0 0.0
          %1701 = vmatprep.subr.mxu0 0.0
          %1702 = vmatpush2.msra.mxu0 0.0
          %1703 = vmatprep.subr.mxu0 0.0
          %1704 = vmatpush2.msra.mxu0 0.0
          %1705 = vmatprep.subr.mxu0 0.0
          %1706 = vmatpush2.msra.mxu0 0.0
          %1707 = vmatprep.subr.mxu0 0.0
          %1708 = vmatpush2.msra.mxu0 0.0
          %1709 = vmatprep.subr.mxu0 0.0
          %1710 = vmatpush2.msra.mxu0 0.0
          %1711 = vmatprep.subr.mxu0 0.0
          %1712 = vmatpush2.msra.mxu0 0.0
          %1713 = vmatprep.subr.mxu0 0.0
          %1714 = vmatpush2.msra.mxu0 0.0
          %1715 = vmatprep.subr.mxu0 0.0
          %1716 = vmatpush2.msra.mxu0 0.0
          %1717 = vmatprep.subr.mxu0 0.0
          %1718 = vmatpush2.msra.mxu0 0.0
          %1719 = vmatprep.subr.mxu0 0.0
          %1720 = vmatpush2.msra.mxu0 0.0
          %1721 = vmatprep.subr.mxu0 0.0
          %1722 = vmatpush2.msra.mxu0 0.0
          %1723 = vmatprep.subr.mxu0 0.0
          %1724 = vmatpush2.msra.mxu0 0.0
          %1725 = vmatprep.subr.mxu0 0.0
          %1726 = vmatpush2.msra.mxu0 0.0
          %1727 = vmatprep.subr.mxu0 0.0
          %1728 = vmatpush2.msra.mxu0 0.0
          %1729 = vmatprep.mubr.f32.mxu0 0.0
          %1730 = vmatmul.mubr.f32.gmra.mxu0 %v1663
          %v1731 = vpop.f32.mrf.mxu0
          %v1732 = vadd.f32 %v1661, %v1731
          %v1733 = vpop.f32.mrf.mxu0
          %1734 = vdwg.mxu0
          %v1735 = vld [vmem:[%s951] sm:$0x3]
          %v1736 = vld [vmem:[#allocation21] sm:$0xff]
          %v1737 = vld [vmem:[#allocation21 + $0x8] sm:$0xff]
          %v1738 = vld [vmem:[#allocation21 + $0x10] sm:$0xff]
          %v1739 = vld [vmem:[#allocation21 + $0x18] sm:$0xff]
          %v1740 = vld [vmem:[%s19] sm:$0x1]
          %v1742 = vlaneseq
          %v1743 = vshrl.u32 %v1742, 7
          %v1744 = vsub.s32 0, %v1743
          %v1745 = vrot.slane %v1740, %v1744
          %v1748 = vsel %vm1101, %v1735, 0
          %1750 = vmatprep.subr.mxu0 0.0
          %1751 = vmatpush1.msra.mxu0 0.0
          %1752 = vmatprep.subr.mxu0 0.0
          %1753 = vmatpush1.msra.mxu0 0.0
          %1754 = vmatprep.subr.mxu0 0.0
          %1755 = vmatpush1.msra.mxu0 0.0
          %1756 = vmatprep.subr.mxu0 0.0
          %1757 = vmatpush1.msra.mxu0 0.0
          %1758 = vmatprep.subr.mxu0 0.0
          %1759 = vmatpush1.msra.mxu0 0.0
          %1760 = vmatprep.subr.mxu0 0.0
          %1761 = vmatpush1.msra.mxu0 0.0
          %1762 = vmatprep.subr.mxu0 0.0
          %1763 = vmatpush1.msra.mxu0 0.0
          %1764 = vmatprep.subr.mxu0 0.0
          %1765 = vmatpush1.msra.mxu0 0.0
          %1766 = vmatprep.subr.mxu0 0.0
          %1767 = vmatpush1.msra.mxu0 0.0
          %1768 = vmatprep.subr.mxu0 0.0
          %1769 = vmatpush1.msra.mxu0 0.0
          %1770 = vmatprep.subr.mxu0 0.0
          %1771 = vmatpush1.msra.mxu0 0.0
          %1772 = vmatprep.subr.mxu0 0.0
          %1773 = vmatpush1.msra.mxu0 0.0
          %1774 = vmatprep.subr.mxu0 0.0
          %1775 = vmatpush1.msra.mxu0 %v1739
          %1776 = vmatprep.subr.mxu0 0.0
          %1777 = vmatpush1.msra.mxu0 %v1738
          %1778 = vmatprep.subr.mxu0 0.0
          %1779 = vmatpush1.msra.mxu0 %v1737
          %1780 = vmatprep.subr.mxu0 0.0
          %1781 = vmatpush1.msra.mxu0 %v1736
          %1782 = vmatprep.subr.mxu0 0.0
          %1783 = vmatpush2.msra.mxu0 0.0
          %1784 = vmatprep.subr.mxu0 0.0
          %1785 = vmatpush2.msra.mxu0 0.0
          %1786 = vmatprep.subr.mxu0 0.0
          %1787 = vmatpush2.msra.mxu0 0.0
          %1788 = vmatprep.subr.mxu0 0.0
          %1789 = vmatpush2.msra.mxu0 0.0
          %1790 = vmatprep.subr.mxu0 0.0
          %1791 = vmatpush2.msra.mxu0 0.0
          %1792 = vmatprep.subr.mxu0 0.0
          %1793 = vmatpush2.msra.mxu0 0.0
          %1794 = vmatprep.subr.mxu0 0.0
          %1795 = vmatpush2.msra.mxu0 0.0
          %1796 = vmatprep.subr.mxu0 0.0
          %1797 = vmatpush2.msra.mxu0 0.0
          %1798 = vmatprep.subr.mxu0 0.0
          %1799 = vmatpush2.msra.mxu0 0.0
          %1800 = vmatprep.subr.mxu0 0.0
          %1801 = vmatpush2.msra.mxu0 0.0
          %1802 = vmatprep.subr.mxu0 0.0
          %1803 = vmatpush2.msra.mxu0 0.0
          %1804 = vmatprep.subr.mxu0 0.0
          %1805 = vmatpush2.msra.mxu0 0.0
          %1806 = vmatprep.subr.mxu0 0.0
          %1807 = vmatpush2.msra.mxu0 0.0
          %1808 = vmatprep.subr.mxu0 0.0
          %1809 = vmatpush2.msra.mxu0 0.0
          %1810 = vmatprep.subr.mxu0 0.0
          %1811 = vmatpush2.msra.mxu0 0.0
          %1812 = vmatprep.subr.mxu0 0.0
          %1813 = vmatpush2.msra.mxu0 0.0
          %1814 = vmatprep.mubr.f32.mxu0 0.0
          %1815 = vmatmul.mubr.f32.gmra.mxu0 %v1748
          %v1816 = vpop.f32.mrf.mxu0
          %v1817 = vadd.f32 %v1745, %v1816
          %v1818 = vpop.f32.mrf.mxu0
          %1819 = vdwg.mxu0
          %v1820 = vadd.f32 %v1732, %v1817
          %v1821 = vxor.u32 %v1820, 2147483648
          %v1822 = vmul.f32 %v1821, 1.442695
          %v1823 = vpow.pop %v1822
          %v1824 = vadd.f32 %v1823, 1.0
          %v1825 = vrcp.pop %v1824
          %v1826 = vmul.f32 1.0, %v1825
          %1828 = vrot.lane.b32.xlu0 %v1817, 64
          %v1829 = vpop.permute.xlu0 %1828
          %v1831 = vmul.f32 %v1826, %v1829
          %1833 = vrot.lane.b32.xlu0 %v1831, 64
          %v1834 = vpop.permute.xlu0 %1833
          %v1836 = vadd.f32 %v1732, %v1834
          %v1837 = vtanh.pop %v1836
          %v1838 = vsub.f32 1.0, %v1826
          %1840 = vrot.lane.b32.xlu0 %v1837, 96
          %v1841 = vpop.permute.xlu0 %1840
          %v1843 = vmul.f32 %v1838, %v1841
          %1844 = vrot.lane.b32.xlu0 %v1735, 32
          %v1845 = vpop.permute.xlu0 %1844
          %v1847 = vmul.f32 %v1826, %v1845
          %v1848 = vadd.f32 %v1843, %v1847
          %1850 = vrot.lane.b32.xlu0 %v1370, 96
          %v1851 = vpop.permute.xlu0 %1850
          %v1853 = vsel %vm1101, %v1851, %v1848
          %1854 = vst.msk [vmem:[#allocation23] sm:$0x3] %vm1650, %v1853
        $region156: #{tpu_custom_call.1} parent=103 // pred_fallthru
          _
        %p1855 = scmp.lt.s32.totalorder %s47, 0
        %s1856 = scalar_select %p1855, %s47, 0
        %s1857 = smul.addr %s1856, 2
        %s1858 = scalar_lea.vmem %s23, %s1857
        // Predicated region
        $region157: #{tpu_custom_call.1} parent=103 // pred_check
          %p1859 = pneg %p546
        $region158: #{tpu_custom_call.1} parent=103 // pred_check_branch
          %1861 = sbr.rel (%p1859) target = $region160
        $region159: #{tpu_custom_call.1} parent=103 // pred_region
          %s1863 = ssub.s32 32, 32
          %1864 = vsyncadd [#allocation7], %s1863
          %s1865 = smul.addr %s47, 32
          %s1866 = scalar_lea.hbm %s21, %s1865
          %s1868 = sshll.u32 [#allocation23], 4
          %s1869 = int_to_ptr.vmem [resolvable:$true] %s1868
          %1871 = dma.vmem_to_hbm [thread:$0]  %s1869, 32, %s1866, [#allocation7]
        $region160: #{tpu_custom_call.1} parent=103 // pred_fallthru
          _
        // Predicated region
        $region161: #{tpu_custom_call.1} parent=103 // pred_check
          %p1872 = pneg %p572
        $region162: #{tpu_custom_call.1} parent=103 // pred_check_branch
          %1874 = sbr.rel (%p1872) target = $region164
        $region163: #{tpu_custom_call.1} parent=103 // pred_region
          %s1876 = ssub.s32 32, 32
          %1877 = vsyncadd [#allocation25], %s1876
          %s1878 = smul.addr %s47, 32
          %s1879 = scalar_lea.hbm %s22, %s1878
          %s1881 = sshll.u32 [#allocation24], 4
          %s1882 = int_to_ptr.vmem [resolvable:$true] %s1881
          %1884 = dma.vmem_to_hbm [thread:$0]  %s1882, 32, %s1879, [#allocation25]
        $region164: #{tpu_custom_call.1} parent=103 // pred_fallthru
          _
        // Predicated region
        $region165: #{tpu_custom_call.1} parent=103 // pred_check
          %p1885 = pneg %p598
        $region166: #{tpu_custom_call.1} parent=103 // pred_check_branch
          %1887 = sbr.rel (%p1885) target = $region168
        $region167: #{tpu_custom_call.1} parent=103 // pred_region
          _
        $region168: #{tpu_custom_call.1} parent=103 // pred_fallthru
          _
        // Predicated region
        $region169: #{tpu_custom_call.1} parent=103 // pred_check
          %p1888 = pneg %p546
        $region170: #{tpu_custom_call.1} parent=103 // pred_check_branch
          %1890 = sbr.rel (%p1888) target = $region172
        $region171: #{tpu_custom_call.1} parent=103 // pred_region
          %1891 = dma.done [#allocation7], 32
        $region172: #{tpu_custom_call.1} parent=103 // pred_fallthru
          _
        // Predicated region
        $region173: #{tpu_custom_call.1} parent=103 // pred_check
          %p1892 = pneg %p572
        $region174: #{tpu_custom_call.1} parent=103 // pred_check_branch
          %1894 = sbr.rel (%p1892) target = $region176
        $region175: #{tpu_custom_call.1} parent=103 // pred_region
          %1895 = dma.done [#allocation25], 32
        $region176: #{tpu_custom_call.1} parent=103 // pred_fallthru
          _
        // Predicated region
        $region177: #{tpu_custom_call.1} parent=103 // pred_check
          %p1896 = pneg %p598
        $region178: #{tpu_custom_call.1} parent=103 // pred_check_branch
          %1898 = sbr.rel (%p1896) target = $region180
        $region179: #{tpu_custom_call.1} parent=103 // pred_region
          %p1899 = scmp.lt.s32.totalorder %s47, 0
          %s1900 = scalar_select %p1899, %s47, 0
          %s1901 = smul.addr %s1900, 2
          %s1902 = scalar_lea.vmem %s23, %s1901
        $region180: #{tpu_custom_call.1} parent=103 // pred_fallthru
          _
      $region104: #{tpu_custom_call.1} parent=5 // pred_fallthru
        _
      %p1903 = scmp.le.s32.totalorder 2, %s38
      // Predicated region
      $region181: #{tpu_custom_call.1} parent=5 // pred_check
        %p1904 = pneg %p1903
      $region182: #{tpu_custom_call.1} parent=5 // pred_check_branch
        %1906 = sbr.rel (%p1904) target = $region184
      $region183: #{tpu_custom_call.1} parent=5 // pred_region
        %s1907 = ssub.s32 %s38, 2
      $region184: #{tpu_custom_call.1} parent=5 // pred_fallthru
        _
    $region6: #{tpu_custom_call.1} parent=1 // loop_footer
      %s42 = sadd.s32 1, %s38
    $region7: #{tpu_custom_call.1} parent=1 // loop_footer_branch
      %37 = sbr.rel target = $region3
    $region8: #{tpu_custom_call.1} parent=1 // loop_exit
      _
    %1908 = vsyncpa [#allocation6], 1
    %s1909 = scalar_lea.sflag [#allocation6], 1
    %1910 = vsyncpa %s1909, 1
    %1911 = vsyncpa [#allocation9], 1
    %1912 = vsyncpa [#allocation13], 1
    %1913 = vsyncpa [#allocation16], 1
    %1914 = vsyncpa [#allocation19], 1
    %1915 = vsyncpa [#allocation22], 1
    %1916 = vsyncpa [#allocation7], 1
    %s1917 = scalar_lea.sflag [#allocation7], 1
    %1918 = vsyncpa %s1917, 1
    %1919 = vsyncpa [#allocation25], 1

</llo_original>
